<compile_context>
chip_gen: v7x
topology: tpu7x:2x2x1
jax: 0.10.0
libtpu: 0.0.40
codegen_flags: <defaults>
</compile_context>

<pallas_src>
import jax
import jax.numpy as jnp
from jax.experimental import pallas as pl
from jax.experimental.pallas import tpu as pltpu

LANE = 128  # lane alignment for feature dims (128 already saturates the v5e MXU)


def _round_up(n, m):
    return ((n + m - 1) // m) * m


def _vmem_capacity_bytes():
    """Per-TensorCore VMEM capacity (v5e/v6e: 128 MiB, v7x: 64 MiB)."""
    try:
        info = pltpu.get_tpu_info()
        cap = getattr(info, "vmem_capacity_bytes", None)
        if cap:
            return int(cap)
    except Exception:
        pass
    return 128 * 1024 * 1024


def _swish_f32(x):
    # x * sigmoid(x) == 0.5 * x * (1 + tanh(0.5 * x)): one EUP transcendental
    # (tanh), the scale/adds go to the VALU. Exact, f32 throughout.
    return 0.5 * x * (1.0 + jnp.tanh(0.5 * x))


def autoencoder_kernel(x_ref,
                       w1_ref, b1_ref,
                       w23_ref, b23_ref,
                       w4_ref, b4_ref,
                       o_ref):
    """One (TB, Dp) batch tile of the fused eval-mode forward.

    h = swish(x @ W1 + b1)                 # encoder Linear(D, D/2) + Swish (+Dropout=id)
    d = swish(h @ (W2@W3) + (b2@W3 + b3))  # encoder Linear(D/2,D/4) folded into decoder Linear(D/4,D/2)
    y = d @ W4 + b4                        # decoder Linear(D/2, D)
    """
    xb = x_ref[...].astype(jnp.bfloat16)

    h = jnp.dot(xb, w1_ref[...], preferred_element_type=jnp.float32) + b1_ref[...]
    h = _swish_f32(h)

    d = jnp.dot(h.astype(jnp.bfloat16), w23_ref[...],
                preferred_element_type=jnp.float32) + b23_ref[...]
    d = _swish_f32(d)

    y = jnp.dot(d.astype(jnp.bfloat16), w4_ref[...],
                preferred_element_type=jnp.float32) + b4_ref[...]

    o_ref[...] = y.astype(o_ref.dtype)


def _pallas_forward(xp, kparams, TB, Dp, Hp, single_buffer_weights, vmem_cap):
    """Build and invoke the pallas_call for an already-padded (Bp, Dp) input."""
    Bp = xp.shape[0]
    resident = lambda i: (0, 0)   # same block every grid step -> stays in VMEM

    if single_buffer_weights:
        # Constant index_map => one VMEM buffer is enough (default would be 2).
        def wspec(shape):
            return pl.BlockSpec(shape, resident, pipeline_mode=pl.Buffered(1))
        wbufs = 1
    else:
        def wspec(shape):
            return pl.BlockSpec(shape, resident)
        wbufs = 2

    # Generation-aware VMEM budget from the actual allocation sizes + headroom.
    bf16, f32 = 2, 4
    needed = ((Dp * Hp + Hp * Hp + Hp * Dp) * bf16
              + (2 * Hp + Dp) * f32) * wbufs                    # weights + biases
    needed += 2 * 2 * TB * Dp * f32                             # double-buffered x / out tiles
    needed += TB * (2 * Hp * (f32 + bf16) + Dp * (f32 + bf16))  # h, d, y + bf16 casts
    vmem_limit = min(int(vmem_cap * 0.85),
                     max(32 * 1024 * 1024, int(needed * 1.5)))

    call = pl.pallas_call(
        autoencoder_kernel,
        out_shape=jax.ShapeDtypeStruct((Bp, Dp), xp.dtype),
        grid=(Bp // TB,),
        in_specs=[
            pl.BlockSpec((TB, Dp), lambda i: (i, 0)),   # x tile (double-buffered)
            wspec((Dp, Hp)),                            # W1  (bf16, resident)
            wspec((1, Hp)),                             # b1  (f32, resident)
            wspec((Hp, Hp)),                            # W23 (bf16, resident)
            wspec((1, Hp)),                             # b23 (f32, resident)
            wspec((Hp, Dp)),                            # W4  (bf16, resident)
            wspec((1, Dp)),                             # b4  (f32, resident)
        ],
        out_specs=pl.BlockSpec((TB, Dp), lambda i: (i, 0)),
        compiler_params=pltpu.CompilerParams(
            dimension_semantics=("parallel",),          # shard batch tiles across TCs on v7x
            vmem_limit_bytes=vmem_limit,
        ),
    )
    return call(xp,
                kparams["w1"], kparams["b1"],
                kparams["w23"], kparams["b23"],
                kparams["w4"], kparams["b4"])


def autoencoder_forward(x, kparams, *, block_b=256):
    """x: [B, D] float32. kparams: padded/folded kernel params (see init_params)."""
    B, D = x.shape
    Dp, Hp = kparams["w1"].shape          # padded input / hidden widths

    cap = _vmem_capacity_bytes()
    small_vmem = cap <= 64 * 1024 * 1024  # v7x-like: 64 MiB VMEM, 2 TensorCores

    # Batch tile: multiple of 8 sublanes, as large as reasonable.
    TB = min(block_b, _round_up(B, 8))
    if small_vmem and B > 8:
        # Keep >= 2 batch tiles so both v7x TensorCores get work.
        TB = min(TB, _round_up((B + 1) // 2, 8))
    Bp = _round_up(B, TB)

    # Skip the extra pad/slice HBM passes when shapes are already aligned.
    needs_pad = (Bp != B) or (Dp != D)
    if needs_pad:
        # Zero rows/lanes propagate to zeros through the zero-padded weights,
        # so the un-padded output slice is exact.
        xp = jnp.zeros((Bp, Dp), x.dtype).at[:B, :D].set(x)
        # TODO(synk): when only the batch is ragged, a pl.when-masked last tile
        # would avoid materializing this padded copy entirely.
    else:
        xp = x

    try:
        out_p = _pallas_forward(xp, kparams, TB, Dp, Hp, True, cap)
    except Exception:
        # Fallback: default double-buffered weight specs if this JAX version
        # rejects pipeline_mode=pl.Buffered(1).
        out_p = _pallas_forward(xp, kparams, TB, Dp, Hp, False, cap)

    return out_p[:B, :D] if needs_pad else out_p


def init_params(key, input_dim, lane=LANE):
    """Init matching nn.Linear shapes; returns (kernel_params, reference_params).

    PyTorch Linear weight is (out, in); we store the transpose (in, out) so the
    kernel computes x @ W. Kernel params are lane-padded, eval-folded, and bf16
    (weights) / f32 (biases). Reference params are the raw f32 un-padded set.
    """
    d = input_dim
    h = d // 2
    l = h // 2
    ks = jax.random.split(key, 8)

    def linear(kw, kb, fan_in, fan_out):
        bound = 1.0 / (fan_in ** 0.5)
        w = jax.random.uniform(kw, (fan_in, fan_out), jnp.float32, -bound, bound)
        b = jax.random.uniform(kb, (1, fan_out), jnp.float32, -bound, bound)
        return w, b

    w1, b1 = linear(ks[0], ks[1], d, h)   # encoder Linear(d, d//2)
    w2, b2 = linear(ks[2], ks[3], h, l)   # encoder Linear(d//2, d//4)
    w3, b3 = linear(ks[4], ks[5], l, h)   # decoder Linear(d//4, d//2)
    w4, b4 = linear(ks[6], ks[7], h, d)   # decoder Linear(d//2, d)

    ref = dict(w1=w1, b1=b1, w2=w2, b2=b2, w3=w3, b3=b3, w4=w4, b4=b4)

    # Eval-only fold of the two linears with no nonlinearity between them
    # (encoder output has no activation; Dropout is identity in eval mode).
    w23 = w2 @ w3
    b23 = b2 @ w3 + b3

    dp = _round_up(d, lane)
    hp = _round_up(h, lane)

    def pad(a, rows, cols):
        return jnp.zeros((rows, cols), a.dtype).at[:a.shape[0], :a.shape[1]].set(a)

    kp = dict(
        w1=pad(w1, dp, hp).astype(jnp.bfloat16),
        b1=pad(b1, 1, hp),                          # f32
        w23=pad(w23, hp, hp).astype(jnp.bfloat16),
        b23=pad(b23, 1, hp),                        # f32
        w4=pad(w4, hp, dp).astype(jnp.bfloat16),
        b4=pad(b4, 1, dp),                          # f32
    )
    return kp, ref


def reference_forward(x, p):
    """Pure-JAX f32 reference of the original (un-folded, un-padded) module in eval mode."""
    def swish(v):
        return v * jax.nn.sigmoid(v)
    h = swish(x @ p["w1"] + p["b1"])
    z = h @ p["w2"] + p["b2"]            # Dropout = identity in eval mode
    d = swish(z @ p["w3"] + p["b3"])
    return d @ p["w4"] + p["b4"]


if __name__ == "__main__":
    key = jax.random.PRNGKey(0)
    k_x, k_p = jax.random.split(key)

    batch = 256          # exercises the batch grid (2 tiles of 128 on v7x-like parts)
    input_dim = 64       # -> hidden 32, latent 16 (padded to 128 lanes internally)

    x = jax.random.normal(k_x, (batch, input_dim), jnp.float32)
    kparams, rparams = init_params(k_p, input_dim)

    out = autoencoder_forward(x, kparams)
    out = jax.block_until_ready(out)

    ref = reference_forward(x, rparams)
    assert out.shape == (batch, input_dim)
    max_err = float(jnp.max(jnp.abs(out - ref)))
    # bf16 weights / matmul operands with f32 accumulation -> small rounding vs f32 reference.
    assert jnp.allclose(out, ref, atol=5e-2, rtol=5e-2), \
        f"mismatch vs reference, max abs err {max_err}"

    print("KERNEL_OK")
</pallas_src>

<mosaic_0001>
module attributes {stable_mosaic.version = 11 : i64} {
  func.func @autoencoder_kernel(%arg0: i32, %arg1: memref<256x128xf32, #tpu.memory_space<vmem>>, %arg2: memref<128x128xbf16, #tpu.memory_space<vmem>>, %arg3: memref<1x128xf32, #tpu.memory_space<vmem>>, %arg4: memref<128x128xbf16, #tpu.memory_space<vmem>>, %arg5: memref<1x128xf32, #tpu.memory_space<vmem>>, %arg6: memref<128x128xbf16, #tpu.memory_space<vmem>>, %arg7: memref<1x128xf32, #tpu.memory_space<vmem>>, %arg8: memref<256x128xf32, #tpu.memory_space<vmem>>) attributes {dimension_semantics = [#tpu.dimension_semantics<parallel>], iteration_bounds = array<i64: 1>, scalar_prefetch = 0 : i64, scratch_operands = 0 : i64, tpu.core_type = #tpu.core_type<tc>, window_params = [{transform_indices = @transform_0, window_bounds = array<i64: 256, 128>}, {pipeline_mode = #tpu.pipeline_mode<synchronous>, transform_indices = @transform_1, window_bounds = array<i64: 128, 128>}, {pipeline_mode = #tpu.pipeline_mode<synchronous>, transform_indices = @transform_2, window_bounds = array<i64: 1, 128>}, {pipeline_mode = #tpu.pipeline_mode<synchronous>, transform_indices = @transform_3, window_bounds = array<i64: 128, 128>}, {pipeline_mode = #tpu.pipeline_mode<synchronous>, transform_indices = @transform_4, window_bounds = array<i64: 1, 128>}, {pipeline_mode = #tpu.pipeline_mode<synchronous>, transform_indices = @transform_5, window_bounds = array<i64: 128, 128>}, {pipeline_mode = #tpu.pipeline_mode<synchronous>, transform_indices = @transform_6, window_bounds = array<i64: 1, 128>}, {transform_indices = @transform_7, window_bounds = array<i64: 256, 128>}]} {
    %c0 = arith.constant 0 : index
    %c0_0 = arith.constant 0 : index
    %0 = vector.load %arg1[%c0, %c0_0] : memref<256x128xf32, #tpu.memory_space<vmem>>, vector<256x128xf32>
    %1 = arith.truncf %0 : vector<256x128xf32> to vector<256x128xbf16>
    %c0_1 = arith.constant 0 : index
    %c0_2 = arith.constant 0 : index
    %2 = vector.load %arg2[%c0_1, %c0_2] : memref<128x128xbf16, #tpu.memory_space<vmem>>, vector<128x128xbf16>
    %cst = arith.constant dense<0.000000e+00> : vector<256x128xf32>
    %3 = tpu.matmul %1, %2, %cst {dimension_numbers = #tpu.dot_dimension_numbers<[1], [0], [0], [1], [0, 0, 1, 1], [], []>} : vector<256x128xbf16>, vector<128x128xbf16>, vector<256x128xf32> -> vector<256x128xf32>
    %c0_3 = arith.constant 0 : index
    %c0_4 = arith.constant 0 : index
    %4 = vector.load %arg3[%c0_3, %c0_4] : memref<1x128xf32, #tpu.memory_space<vmem>>, vector<1x128xf32>
    %5 = vector.broadcast %4 : vector<1x128xf32> to vector<256x128xf32>
    %6 = arith.addf %3, %5 : vector<256x128xf32>
    %cst_5 = arith.constant 5.000000e-01 : f32
    %7 = vector.broadcast %cst_5 : f32 to vector<256x128xf32>
    %8 = arith.mulf %7, %6 : vector<256x128xf32>
    %cst_6 = arith.constant 5.000000e-01 : f32
    %9 = vector.broadcast %cst_6 : f32 to vector<256x128xf32>
    %10 = arith.mulf %9, %6 : vector<256x128xf32>
    %11 = math.tanh %10 : vector<256x128xf32>
    %cst_7 = arith.constant 1.000000e+00 : f32
    %12 = vector.broadcast %cst_7 : f32 to vector<256x128xf32>
    %13 = arith.addf %12, %11 : vector<256x128xf32>
    %14 = arith.mulf %8, %13 : vector<256x128xf32>
    %15 = arith.truncf %14 : vector<256x128xf32> to vector<256x128xbf16>
    %c0_8 = arith.constant 0 : index
    %c0_9 = arith.constant 0 : index
    %16 = vector.load %arg4[%c0_8, %c0_9] : memref<128x128xbf16, #tpu.memory_space<vmem>>, vector<128x128xbf16>
    %cst_10 = arith.constant dense<0.000000e+00> : vector<256x128xf32>
    %17 = tpu.matmul %15, %16, %cst_10 {dimension_numbers = #tpu.dot_dimension_numbers<[1], [0], [0], [1], [0, 0, 1, 1], [], []>} : vector<256x128xbf16>, vector<128x128xbf16>, vector<256x128xf32> -> vector<256x128xf32>
    %c0_11 = arith.constant 0 : index
    %c0_12 = arith.constant 0 : index
    %18 = vector.load %arg5[%c0_11, %c0_12] : memref<1x128xf32, #tpu.memory_space<vmem>>, vector<1x128xf32>
    %19 = vector.broadcast %18 : vector<1x128xf32> to vector<256x128xf32>
    %20 = arith.addf %17, %19 : vector<256x128xf32>
    %cst_13 = arith.constant 5.000000e-01 : f32
    %21 = vector.broadcast %cst_13 : f32 to vector<256x128xf32>
    %22 = arith.mulf %21, %20 : vector<256x128xf32>
    %cst_14 = arith.constant 5.000000e-01 : f32
    %23 = vector.broadcast %cst_14 : f32 to vector<256x128xf32>
    %24 = arith.mulf %23, %20 : vector<256x128xf32>
    %25 = math.tanh %24 : vector<256x128xf32>
    %cst_15 = arith.constant 1.000000e+00 : f32
    %26 = vector.broadcast %cst_15 : f32 to vector<256x128xf32>
    %27 = arith.addf %26, %25 : vector<256x128xf32>
    %28 = arith.mulf %22, %27 : vector<256x128xf32>
    %29 = arith.truncf %28 : vector<256x128xf32> to vector<256x128xbf16>
    %c0_16 = arith.constant 0 : index
    %c0_17 = arith.constant 0 : index
    %30 = vector.load %arg6[%c0_16, %c0_17] : memref<128x128xbf16, #tpu.memory_space<vmem>>, vector<128x128xbf16>
    %cst_18 = arith.constant dense<0.000000e+00> : vector<256x128xf32>
    %31 = tpu.matmul %29, %30, %cst_18 {dimension_numbers = #tpu.dot_dimension_numbers<[1], [0], [0], [1], [0, 0, 1, 1], [], []>} : vector<256x128xbf16>, vector<128x128xbf16>, vector<256x128xf32> -> vector<256x128xf32>
    %c0_19 = arith.constant 0 : index
    %c0_20 = arith.constant 0 : index
    %32 = vector.load %arg7[%c0_19, %c0_20] : memref<1x128xf32, #tpu.memory_space<vmem>>, vector<1x128xf32>
    %33 = vector.broadcast %32 : vector<1x128xf32> to vector<256x128xf32>
    %34 = arith.addf %31, %33 : vector<256x128xf32>
    %c0_21 = arith.constant 0 : index
    %c0_22 = arith.constant 0 : index
    %35 = vector.load %arg8[%c0_21, %c0_22] : memref<256x128xf32, #tpu.memory_space<vmem>>, vector<256x128xf32>
    tpu.vector_store %arg8[%c0_21, %c0_22], %34 {strides = array<i32>} : memref<256x128xf32, #tpu.memory_space<vmem>>, vector<256x128xf32>,
    return
  }
  func.func @transform_0(%arg0: i32) -> (i32, i32) {
    %c0_i32 = arith.constant 0 : i32
    %c0_i32_0 = arith.constant 0 : i32
    return %arg0, %c0_i32 : i32, i32
  }
  func.func @transform_1(%arg0: i32) -> (i32, i32) {
    %c0_i32 = arith.constant 0 : i32
    %c0_i32_0 = arith.constant 0 : i32
    %c0_i32_1 = arith.constant 0 : i32
    return %c0_i32, %c0_i32_0 : i32, i32
  }
  func.func @transform_2(%arg0: i32) -> (i32, i32) {
    %c0_i32 = arith.constant 0 : i32
    %c0_i32_0 = arith.constant 0 : i32
    %c0_i32_1 = arith.constant 0 : i32
    return %c0_i32, %c0_i32_0 : i32, i32
  }
  func.func @transform_3(%arg0: i32) -> (i32, i32) {
    %c0_i32 = arith.constant 0 : i32
    %c0_i32_0 = arith.constant 0 : i32
    %c0_i32_1 = arith.constant 0 : i32
    return %c0_i32, %c0_i32_0 : i32, i32
  }
  func.func @transform_4(%arg0: i32) -> (i32, i32) {
    %c0_i32 = arith.constant 0 : i32
    %c0_i32_0 = arith.constant 0 : i32
    %c0_i32_1 = arith.constant 0 : i32
    return %c0_i32, %c0_i32_0 : i32, i32
  }
  func.func @transform_5(%arg0: i32) -> (i32, i32) {
    %c0_i32 = arith.constant 0 : i32
    %c0_i32_0 = arith.constant 0 : i32
    %c0_i32_1 = arith.constant 0 : i32
    return %c0_i32, %c0_i32_0 : i32, i32
  }
  func.func @transform_6(%arg0: i32) -> (i32, i32) {
    %c0_i32 = arith.constant 0 : i32
    %c0_i32_0 = arith.constant 0 : i32
    %c0_i32_1 = arith.constant 0 : i32
    return %c0_i32, %c0_i32_0 : i32, i32
  }
  func.func @transform_7(%arg0: i32) -> (i32, i32) {
    %c0_i32 = arith.constant 0 : i32
    %c0_i32_0 = arith.constant 0 : i32
    return %arg0, %c0_i32 : i32, i32
  }
}

module attributes {stable_mosaic.version = 11 : i64} {
  func.func @autoencoder_kernel(%arg0: i32, %arg1: memref<256x128xf32, #tpu.memory_space<vmem>>, %arg2: memref<128x128xbf16, #tpu.memory_space<vmem>>, %arg3: memref<1x128xf32, #tpu.memory_space<vmem>>, %arg4: memref<128x128xbf16, #tpu.memory_space<vmem>>, %arg5: memref<1x128xf32, #tpu.memory_space<vmem>>, %arg6: memref<128x128xbf16, #tpu.memory_space<vmem>>, %arg7: memref<1x128xf32, #tpu.memory_space<vmem>>, %arg8: memref<256x128xf32, #tpu.memory_space<vmem>>) attributes {dimension_semantics = [#tpu.dimension_semantics<parallel>], iteration_bounds = array<i64: 1>, scalar_prefetch = 0 : i64, scratch_operands = 0 : i64, tpu.core_type = #tpu.core_type<tc>, window_params = [{transform_indices = @transform_0, window_bounds = array<i64: 256, 128>}, {pipeline_mode = #tpu.pipeline_mode<synchronous>, transform_indices = @transform_1, window_bounds = array<i64: 128, 128>}, {pipeline_mode = #tpu.pipeline_mode<synchronous>, transform_indices = @transform_2, window_bounds = array<i64: 1, 128>}, {pipeline_mode = #tpu.pipeline_mode<synchronous>, transform_indices = @transform_3, window_bounds = array<i64: 128, 128>}, {pipeline_mode = #tpu.pipeline_mode<synchronous>, transform_indices = @transform_4, window_bounds = array<i64: 1, 128>}, {pipeline_mode = #tpu.pipeline_mode<synchronous>, transform_indices = @transform_5, window_bounds = array<i64: 128, 128>}, {pipeline_mode = #tpu.pipeline_mode<synchronous>, transform_indices = @transform_6, window_bounds = array<i64: 1, 128>}, {transform_indices = @transform_7, window_bounds = array<i64: 256, 128>}]} {
    %c0 = arith.constant 0 : index
    %c0_0 = arith.constant 0 : index
    %0 = vector.load %arg1[%c0, %c0_0] : memref<256x128xf32, #tpu.memory_space<vmem>>, vector<256x128xf32>
    %1 = arith.truncf %0 : vector<256x128xf32> to vector<256x128xbf16>
    %c0_1 = arith.constant 0 : index
    %c0_2 = arith.constant 0 : index
    %2 = vector.load %arg2[%c0_1, %c0_2] : memref<128x128xbf16, #tpu.memory_space<vmem>>, vector<128x128xbf16>
    %cst = arith.constant dense<0.000000e+00> : vector<256x128xf32>
    %3 = tpu.matmul %1, %2, %cst {dimension_numbers = #tpu.dot_dimension_numbers<[1], [0], [0], [1], [0, 0, 1, 1], [], []>} : vector<256x128xbf16>, vector<128x128xbf16>, vector<256x128xf32> -> vector<256x128xf32>
    %c0_3 = arith.constant 0 : index
    %c0_4 = arith.constant 0 : index
    %4 = vector.load %arg3[%c0_3, %c0_4] : memref<1x128xf32, #tpu.memory_space<vmem>>, vector<1x128xf32>
    %5 = vector.broadcast %4 : vector<1x128xf32> to vector<256x128xf32>
    %6 = arith.addf %3, %5 : vector<256x128xf32>
    %cst_5 = arith.constant 5.000000e-01 : f32
    %7 = vector.broadcast %cst_5 : f32 to vector<256x128xf32>
    %8 = arith.mulf %7, %6 : vector<256x128xf32>
    %cst_6 = arith.constant 5.000000e-01 : f32
    %9 = vector.broadcast %cst_6 : f32 to vector<256x128xf32>
    %10 = arith.mulf %9, %6 : vector<256x128xf32>
    %11 = math.tanh %10 : vector<256x128xf32>
    %cst_7 = arith.constant 1.000000e+00 : f32
    %12 = vector.broadcast %cst_7 : f32 to vector<256x128xf32>
    %13 = arith.addf %12, %11 : vector<256x128xf32>
    %14 = arith.mulf %8, %13 : vector<256x128xf32>
    %15 = arith.truncf %14 : vector<256x128xf32> to vector<256x128xbf16>
    %c0_8 = arith.constant 0 : index
    %c0_9 = arith.constant 0 : index
    %16 = vector.load %arg4[%c0_8, %c0_9] : memref<128x128xbf16, #tpu.memory_space<vmem>>, vector<128x128xbf16>
    %cst_10 = arith.constant dense<0.000000e+00> : vector<256x128xf32>
    %17 = tpu.matmul %15, %16, %cst_10 {dimension_numbers = #tpu.dot_dimension_numbers<[1], [0], [0], [1], [0, 0, 1, 1], [], []>} : vector<256x128xbf16>, vector<128x128xbf16>, vector<256x128xf32> -> vector<256x128xf32>
    %c0_11 = arith.constant 0 : index
    %c0_12 = arith.constant 0 : index
    %18 = vector.load %arg5[%c0_11, %c0_12] : memref<1x128xf32, #tpu.memory_space<vmem>>, vector<1x128xf32>
    %19 = vector.broadcast %18 : vector<1x128xf32> to vector<256x128xf32>
    %20 = arith.addf %17, %19 : vector<256x128xf32>
    %cst_13 = arith.constant 5.000000e-01 : f32
    %21 = vector.broadcast %cst_13 : f32 to vector<256x128xf32>
    %22 = arith.mulf %21, %20 : vector<256x128xf32>
    %cst_14 = arith.constant 5.000000e-01 : f32
    %23 = vector.broadcast %cst_14 : f32 to vector<256x128xf32>
    %24 = arith.mulf %23, %20 : vector<256x128xf32>
    %25 = math.tanh %24 : vector<256x128xf32>
    %cst_15 = arith.constant 1.000000e+00 : f32
    %26 = vector.broadcast %cst_15 : f32 to vector<256x128xf32>
    %27 = arith.addf %26, %25 : vector<256x128xf32>
    %28 = arith.mulf %22, %27 : vector<256x128xf32>
    %29 = arith.truncf %28 : vector<256x128xf32> to vector<256x128xbf16>
    %c0_16 = arith.constant 0 : index
    %c0_17 = arith.constant 0 : index
    %30 = vector.load %arg6[%c0_16, %c0_17] : memref<128x128xbf16, #tpu.memory_space<vmem>>, vector<128x128xbf16>
    %cst_18 = arith.constant dense<0.000000e+00> : vector<256x128xf32>
    %31 = tpu.matmul %29, %30, %cst_18 {dimension_numbers = #tpu.dot_dimension_numbers<[1], [0], [0], [1], [0, 0, 1, 1], [], []>} : vector<256x128xbf16>, vector<128x128xbf16>, vector<256x128xf32> -> vector<256x128xf32>
    %c0_19 = arith.constant 0 : index
    %c0_20 = arith.constant 0 : index
    %32 = vector.load %arg7[%c0_19, %c0_20] : memref<1x128xf32, #tpu.memory_space<vmem>>, vector<1x128xf32>
    %33 = vector.broadcast %32 : vector<1x128xf32> to vector<256x128xf32>
    %34 = arith.addf %31, %33 : vector<256x128xf32>
    %c0_21 = arith.constant 0 : index
    %c0_22 = arith.constant 0 : index
    %35 = vector.load %arg8[%c0_21, %c0_22] : memref<256x128xf32, #tpu.memory_space<vmem>>, vector<256x128xf32>
    tpu.vector_store %arg8[%c0_21, %c0_22], %34 {strides = array<i32>} : memref<256x128xf32, #tpu.memory_space<vmem>>, vector<256x128xf32>,
    return
  }
  func.func @transform_0(%arg0: i32) -> (i32, i32) {
    %c0_i32 = arith.constant 0 : i32
    %c0_i32_0 = arith.constant 0 : i32
    return %arg0, %c0_i32 : i32, i32
  }
  func.func @transform_1(%arg0: i32) -> (i32, i32) {
    %c0_i32 = arith.constant 0 : i32
    %c0_i32_0 = arith.constant 0 : i32
    %c0_i32_1 = arith.constant 0 : i32
    return %c0_i32, %c0_i32_0 : i32, i32
  }
  func.func @transform_2(%arg0: i32) -> (i32, i32) {
    %c0_i32 = arith.constant 0 : i32
    %c0_i32_0 = arith.constant 0 : i32
    %c0_i32_1 = arith.constant 0 : i32
    return %c0_i32, %c0_i32_0 : i32, i32
  }
  func.func @transform_3(%arg0: i32) -> (i32, i32) {
    %c0_i32 = arith.constant 0 : i32
    %c0_i32_0 = arith.constant 0 : i32
    %c0_i32_1 = arith.constant 0 : i32
    return %c0_i32, %c0_i32_0 : i32, i32
  }
  func.func @transform_4(%arg0: i32) -> (i32, i32) {
    %c0_i32 = arith.constant 0 : i32
    %c0_i32_0 = arith.constant 0 : i32
    %c0_i32_1 = arith.constant 0 : i32
    return %c0_i32, %c0_i32_0 : i32, i32
  }
  func.func @transform_5(%arg0: i32) -> (i32, i32) {
    %c0_i32 = arith.constant 0 : i32
    %c0_i32_0 = arith.constant 0 : i32
    %c0_i32_1 = arith.constant 0 : i32
    return %c0_i32, %c0_i32_0 : i32, i32
  }
  func.func @transform_6(%arg0: i32) -> (i32, i32) {
    %c0_i32 = arith.constant 0 : i32
    %c0_i32_0 = arith.constant 0 : i32
    %c0_i32_1 = arith.constant 0 : i32
    return %c0_i32, %c0_i32_0 : i32, i32
  }
  func.func @transform_7(%arg0: i32) -> (i32, i32) {
    %c0_i32 = arith.constant 0 : i32
    %c0_i32_0 = arith.constant 0 : i32
    return %arg0, %c0_i32 : i32, i32
  }
}

</mosaic_0001>

<llo_original>
// kernel: tpu_custom_call.1
$region0: #{tpu_custom_call.1}
  #allocation0 [shape = 'u32[]', space=smem, size = 0x4, offset = 0x4, fixed_abs, tag = 'smem constant byte address 0x4 - core index']
  #allocation1 [shape = 'u32[144,128]{1,0:T(1,128)}', space=vmem, size = 0x12000, scoped, tag = 'internal scratch']
  %s0 = inlined_call_operand.hbm [shape: f32[256,128], index: 0, kind: input, shape index: {}]
  %s1 = inlined_call_operand.hbm [shape: bf16[128,128], index: 1, kind: input, shape index: {}]
  %s2 = inlined_call_operand.vmem [shape: f32[1,128], index: 2, kind: input, shape index: {}]
  %s3 = inlined_call_operand.hbm [shape: bf16[128,128], index: 3, kind: input, shape index: {}]
  %s4 = inlined_call_operand.vmem [shape: f32[1,128], index: 4, kind: input, shape index: {}]
  %s5 = inlined_call_operand.hbm [shape: bf16[128,128], index: 5, kind: input, shape index: {}]
  %s6 = inlined_call_operand.vmem [shape: f32[1,128], index: 6, kind: input, shape index: {}]
  %s7 = inlined_call_operand.hbm [shape: f32[256,128], index: 7, kind: output, shape index: {}]
  %s8 = sld [smem:[#allocation0]]
  $region54: #{tpu_custom_call.1} parent=0
    _
  %s10 = ssub.s32 1, %s8
  %s11 = scalar_select 0, %s10, %s8
  $region1: #{tpu_custom_call.1} parent=0
    #allocation2 [shape = 'u8[131072]{0}', space=vmem, size = 0x20000, scoped, tag = 'input window, operand 0, single buffered']
    #allocation3 [shape = 's32[1]{0}', space=sflag, size = 0x4, scoped, tag = 'scoped memory for tpu_custom_call.1']
    #allocation4 [shape = 's32[1]{0}', space=sflag, size = 0x4, scoped, tag = 'scoped memory for tpu_custom_call.1']
    #allocation5 [shape = 'u8[32768]{0}', space=vmem, size = 0x8000, scoped, tag = 'input window, operand 1, single buffered']
    #allocation6 [shape = 's32[1]{0}', space=sflag, size = 0x4, scoped, tag = 'scoped memory for tpu_custom_call.1']
    #allocation7 [shape = 'u8[32768]{0}', space=vmem, size = 0x8000, scoped, tag = 'input window, operand 3, single buffered']
    #allocation8 [shape = 'u8[32768]{0}', space=vmem, size = 0x8000, scoped, tag = 'input window, operand 5, single buffered']
    #allocation9 [shape = 's32[1]{0}', space=sflag, size = 0x4, scoped, tag = 'scoped memory for tpu_custom_call.1']
    #allocation10 [shape = 'u8[131072]{0}', space=vmem, size = 0x20000, scoped, tag = 'output window, operand 0, single buffered']
    %12 = vsyncpa [#allocation3], 0
    %13 = vsyncpa [#allocation6], 0
    %14 = vsyncpa [#allocation9], 0
    %15 = vsyncpa [#allocation4], 0
    // Predicated region
    $region2: #{tpu_custom_call.1} parent=1 // pred_check
      _
    $region3: #{tpu_custom_call.1} parent=1 // pred_check_branch
      %17 = sbr.rel (0) target = $region5
    $region4: #{tpu_custom_call.1} parent=1 // pred_region
      %s19 = ssub.s32 4096, 4096
      %20 = vsyncadd [#allocation3], %s19
      %s21 = sshll.u32 [#allocation2], 4
      %s22 = int_to_ptr.vmem [resolvable:$true] %s21
      %27 = dma.hbm_to_vmem [thread:$0]  %s0, 4096, %s22, [#allocation3], 128, 128, 8
    $region5: #{tpu_custom_call.1} parent=1 // pred_fallthru
      _
    // Predicated region
    $region6: #{tpu_custom_call.1} parent=1 // pred_check
      _
    $region7: #{tpu_custom_call.1} parent=1 // pred_check_branch
      %29 = sbr.rel (0) target = $region9
    $region8: #{tpu_custom_call.1} parent=1 // pred_region
      %s31 = ssub.s32 1024, 1024
      %32 = vsyncadd [#allocation6], %s31
      %s33 = sshll.u32 [#allocation5], 4
      %s34 = int_to_ptr.vmem [resolvable:$true] %s33
      %39 = dma.hbm_to_vmem [thread:$0]  %s1, 1024, %s34, [#allocation6], 64, 64, 4
    $region9: #{tpu_custom_call.1} parent=1 // pred_fallthru
      _
    // Predicated region
    $region10: #{tpu_custom_call.1} parent=1 // pred_check
      _
    $region11: #{tpu_custom_call.1} parent=1 // pred_check_branch
      %41 = sbr.rel (0) target = $region13
    $region12: #{tpu_custom_call.1} parent=1 // pred_region
      _
    $region13: #{tpu_custom_call.1} parent=1 // pred_fallthru
      _
    // Predicated region
    $region14: #{tpu_custom_call.1} parent=1 // pred_check
      _
    $region15: #{tpu_custom_call.1} parent=1 // pred_check_branch
      %43 = sbr.rel (0) target = $region17
    $region16: #{tpu_custom_call.1} parent=1 // pred_region
      %s45 = ssub.s32 1024, 1024
      %46 = vsyncadd [#allocation6], %s45
      %s47 = sshll.u32 [#allocation7], 4
      %s48 = int_to_ptr.vmem [resolvable:$true] %s47
      %53 = dma.hbm_to_vmem [thread:$0]  %s3, 1024, %s48, [#allocation6], 64, 64, 4
    $region17: #{tpu_custom_call.1} parent=1 // pred_fallthru
      _
    // Predicated region
    $region18: #{tpu_custom_call.1} parent=1 // pred_check
      _
    $region19: #{tpu_custom_call.1} parent=1 // pred_check_branch
      %55 = sbr.rel (0) target = $region21
    $region20: #{tpu_custom_call.1} parent=1 // pred_region
      _
    $region21: #{tpu_custom_call.1} parent=1 // pred_fallthru
      _
    // Predicated region
    $region22: #{tpu_custom_call.1} parent=1 // pred_check
      _
    $region23: #{tpu_custom_call.1} parent=1 // pred_check_branch
      %57 = sbr.rel (0) target = $region25
    $region24: #{tpu_custom_call.1} parent=1 // pred_region
      %s59 = ssub.s32 1024, 1024
      %60 = vsyncadd [#allocation9], %s59
      %s61 = sshll.u32 [#allocation8], 4
      %s62 = int_to_ptr.vmem [resolvable:$true] %s61
      %67 = dma.hbm_to_vmem [thread:$0]  %s5, 1024, %s62, [#allocation9], 64, 64, 4
    $region25: #{tpu_custom_call.1} parent=1 // pred_fallthru
      _
    // Predicated region
    $region26: #{tpu_custom_call.1} parent=1 // pred_check
      _
    $region27: #{tpu_custom_call.1} parent=1 // pred_check_branch
      %69 = sbr.rel (0) target = $region29
    $region28: #{tpu_custom_call.1} parent=1 // pred_region
      _
    $region29: #{tpu_custom_call.1} parent=1 // pred_fallthru
      _
    // Predicated region
    $region30: #{tpu_custom_call.1} parent=1 // pred_check
      _
    $region31: #{tpu_custom_call.1} parent=1 // pred_check_branch
      %71 = sbr.rel (0) target = $region33
    $region32: #{tpu_custom_call.1} parent=1 // pred_region
      %72 = dma.done [#allocation3], 4096
    $region33: #{tpu_custom_call.1} parent=1 // pred_fallthru
      _
    // Predicated region
    $region34: #{tpu_custom_call.1} parent=1 // pred_check
      _
    $region35: #{tpu_custom_call.1} parent=1 // pred_check_branch
      %74 = sbr.rel (0) target = $region37
    $region36: #{tpu_custom_call.1} parent=1 // pred_region
      %75 = dma.done [#allocation6], 1024
    $region37: #{tpu_custom_call.1} parent=1 // pred_fallthru
      _
    // Predicated region
    $region38: #{tpu_custom_call.1} parent=1 // pred_check
      _
    $region39: #{tpu_custom_call.1} parent=1 // pred_check_branch
      %77 = sbr.rel (0) target = $region41
    $region40: #{tpu_custom_call.1} parent=1 // pred_region
      %78 = dma.done [#allocation6], 1024
    $region41: #{tpu_custom_call.1} parent=1 // pred_fallthru
      _
    // Predicated region
    $region42: #{tpu_custom_call.1} parent=1 // pred_check
      _
    $region43: #{tpu_custom_call.1} parent=1 // pred_check_branch
      %80 = sbr.rel (0) target = $region45
    $region44: #{tpu_custom_call.1} parent=1 // pred_region
      %81 = dma.done [#allocation9], 1024
    $region45: #{tpu_custom_call.1} parent=1 // pred_fallthru
      _
    %v83 = vld [vmem:[#allocation2] sm:$0xff]
    %v84 = vld [vmem:[#allocation2 + $0x8] sm:$0xff]
    %v85 = vld [vmem:[#allocation2 + $0x10] sm:$0xff]
    %v86 = vld [vmem:[#allocation2 + $0x18] sm:$0xff]
    %v87 = vld [vmem:[#allocation2 + $0x20] sm:$0xff]
    %v88 = vld [vmem:[#allocation2 + $0x28] sm:$0xff]
    %v89 = vld [vmem:[#allocation2 + $0x30] sm:$0xff]
    %v90 = vld [vmem:[#allocation2 + $0x38] sm:$0xff]
    %v91 = vld [vmem:[#allocation2 + $0x40] sm:$0xff]
    %v92 = vld [vmem:[#allocation2 + $0x48] sm:$0xff]
    %v93 = vld [vmem:[#allocation2 + $0x50] sm:$0xff]
    %v94 = vld [vmem:[#allocation2 + $0x58] sm:$0xff]
    %v95 = vld [vmem:[#allocation2 + $0x60] sm:$0xff]
    %v96 = vld [vmem:[#allocation2 + $0x68] sm:$0xff]
    %v97 = vld [vmem:[#allocation2 + $0x70] sm:$0xff]
    %v98 = vld [vmem:[#allocation2 + $0x78] sm:$0xff]
    %v99 = vld [vmem:[#allocation2 + $0x80] sm:$0xff]
    %v100 = vld [vmem:[#allocation2 + $0x88] sm:$0xff]
    %v101 = vld [vmem:[#allocation2 + $0x90] sm:$0xff]
    %v102 = vld [vmem:[#allocation2 + $0x98] sm:$0xff]
    %v103 = vld [vmem:[#allocation2 + $0xa0] sm:$0xff]
    %v104 = vld [vmem:[#allocation2 + $0xa8] sm:$0xff]
    %v105 = vld [vmem:[#allocation2 + $0xb0] sm:$0xff]
    %v106 = vld [vmem:[#allocation2 + $0xb8] sm:$0xff]
    %v107 = vld [vmem:[#allocation2 + $0xc0] sm:$0xff]
    %v108 = vld [vmem:[#allocation2 + $0xc8] sm:$0xff]
    %v109 = vld [vmem:[#allocation2 + $0xd0] sm:$0xff]
    %v110 = vld [vmem:[#allocation2 + $0xd8] sm:$0xff]
    %v111 = vld [vmem:[#allocation2 + $0xe0] sm:$0xff]
    %v112 = vld [vmem:[#allocation2 + $0xe8] sm:$0xff]
    %v113 = vld [vmem:[#allocation2 + $0xf0] sm:$0xff]
    %v114 = vld [vmem:[#allocation2 + $0xf8] sm:$0xff]
    %v115 = vpack.c.bf16 %v84, %v83
    %v116 = vpack.c.bf16 %v86, %v85
    %v117 = vpack.c.bf16 %v88, %v87
    %v118 = vpack.c.bf16 %v90, %v89
    %v119 = vpack.c.bf16 %v92, %v91
    %v120 = vpack.c.bf16 %v94, %v93
    %v121 = vpack.c.bf16 %v96, %v95
    %v122 = vpack.c.bf16 %v98, %v97
    %v123 = vpack.c.bf16 %v100, %v99
    %v124 = vpack.c.bf16 %v102, %v101
    %v125 = vpack.c.bf16 %v104, %v103
    %v126 = vpack.c.bf16 %v106, %v105
    %v127 = vpack.c.bf16 %v108, %v107
    %v128 = vpack.c.bf16 %v110, %v109
    %v129 = vpack.c.bf16 %v112, %v111
    %v130 = vpack.c.bf16 %v114, %v113
    %v131 = vld [vmem:[#allocation5] sm:$0xf]
    %v132 = vld [vmem:[#allocation5 + $0x4] sm:$0xf]
    %v133 = vld [vmem:[#allocation5 + $0x8] sm:$0xf]
    %v134 = vld [vmem:[#allocation5 + $0xc] sm:$0xf]
    %v135 = vld [vmem:[#allocation5 + $0x10] sm:$0xf]
    %v136 = vld [vmem:[#allocation5 + $0x14] sm:$0xf]
    %v137 = vld [vmem:[#allocation5 + $0x18] sm:$0xf]
    %v138 = vld [vmem:[#allocation5 + $0x1c] sm:$0xf]
    %v139 = vld [vmem:[#allocation5 + $0x20] sm:$0xf]
    %v140 = vld [vmem:[#allocation5 + $0x24] sm:$0xf]
    %v141 = vld [vmem:[#allocation5 + $0x28] sm:$0xf]
    %v142 = vld [vmem:[#allocation5 + $0x2c] sm:$0xf]
    %v143 = vld [vmem:[#allocation5 + $0x30] sm:$0xf]
    %v144 = vld [vmem:[#allocation5 + $0x34] sm:$0xf]
    %v145 = vld [vmem:[#allocation5 + $0x38] sm:$0xf]
    %v146 = vld [vmem:[#allocation5 + $0x3c] sm:$0xf]
    %v147 = vld [vmem:[%s2] sm:$0x1]
    %v149 = vlaneseq
    %v150 = vshrl.u32 %v149, 7
    %v151 = vsub.s32 0, %v150
    %v152 = vrot.slane %v147, %v151
    %v170 = vunpack.c.l.b16 %v131
    %v171 = vunpack.c.l.b16 %v132
    %v172 = vunpack.c.l.b16 %v133
    %v173 = vunpack.c.l.b16 %v134
    %v174 = vunpack.c.l.b16 %v135
    %v175 = vunpack.c.l.b16 %v136
    %v176 = vunpack.c.l.b16 %v137
    %v177 = vunpack.c.l.b16 %v138
    %v178 = vunpack.c.l.b16 %v139
    %v179 = vunpack.c.l.b16 %v140
    %v180 = vunpack.c.l.b16 %v141
    %v181 = vunpack.c.l.b16 %v142
    %v182 = vunpack.c.l.b16 %v143
    %v183 = vunpack.c.l.b16 %v144
    %v184 = vunpack.c.l.b16 %v145
    %v185 = vunpack.c.l.b16 %v146
    %v186 = vpack.c.b16 %v171, %v170
    %v187 = vpack.c.b16 %v173, %v172
    %v188 = vpack.c.b16 %v175, %v174
    %v189 = vpack.c.b16 %v177, %v176
    %v190 = vpack.c.b16 %v179, %v178
    %v191 = vpack.c.b16 %v181, %v180
    %v192 = vpack.c.b16 %v183, %v182
    %v193 = vpack.c.b16 %v185, %v184
    %202 = vmatprep.subr.bf16.mxu0 0
    %203 = vmatpush1.bf16.msra.mxu0 %v186
    %204 = vmatprep.subr.bf16.mxu0 0
    %205 = vmatpush1.bf16.msra.mxu0 %v187
    %206 = vmatprep.subr.bf16.mxu0 0
    %207 = vmatpush1.bf16.msra.mxu0 %v188
    %208 = vmatprep.subr.bf16.mxu0 0
    %209 = vmatpush1.bf16.msra.mxu0 %v189
    %210 = vmatprep.subr.bf16.mxu0 0
    %211 = vmatpush1.bf16.msra.mxu0 %v190
    %212 = vmatprep.subr.bf16.mxu0 0
    %213 = vmatpush1.bf16.msra.mxu0 %v191
    %214 = vmatprep.subr.bf16.mxu0 0
    %215 = vmatpush1.bf16.msra.mxu0 %v192
    %216 = vmatprep.subr.bf16.mxu0 0
    %217 = vmatpush1.bf16.msra.mxu0 %v193
    %218 = vmatprep.subr.bf16.mxu0 0
    %219 = vmatpush1.bf16.msra.mxu0 0
    %220 = vmatprep.subr.bf16.mxu0 0
    %221 = vmatpush1.bf16.msra.mxu0 0
    %222 = vmatprep.subr.bf16.mxu0 0
    %223 = vmatpush1.bf16.msra.mxu0 0
    %224 = vmatprep.subr.bf16.mxu0 0
    %225 = vmatpush1.bf16.msra.mxu0 0
    %226 = vmatprep.subr.bf16.mxu0 0
    %227 = vmatpush1.bf16.msra.mxu0 0
    %228 = vmatprep.subr.bf16.mxu0 0
    %229 = vmatpush1.bf16.msra.mxu0 0
    %230 = vmatprep.subr.bf16.mxu0 0
    %231 = vmatpush1.bf16.msra.mxu0 0
    %232 = vmatprep.subr.bf16.mxu0 0
    %233 = vmatpush1.bf16.msra.mxu0 0
    %234 = vmatprep.mubr.bf16.mxu0 0
    %235 = vmatmul.mubr.bf16.gmra.mrb[0].mxu0 %v115
    %v236 = vpop.f32.mrb[0].mxu0
    %v237 = vadd.f32 %v152, %v236
    %v238 = vpop.f32.mrb[0].mxu0
    %v239 = vpop.f32.mrb[0].mxu0
    %v240 = vadd.f32 %v152, %v239
    %v241 = vpop.f32.mrb[0].mxu0
    %242 = vmatprep.mubr.bf16.mxu0 0
    %243 = vmatmul.mubr.bf16.gmra.mrb[0].mxu0 %v116
    %v244 = vpop.f32.mrb[0].mxu0
    %v245 = vadd.f32 %v152, %v244
    %v246 = vpop.f32.mrb[0].mxu0
    %v247 = vpop.f32.mrb[0].mxu0
    %v248 = vadd.f32 %v152, %v247
    %v249 = vpop.f32.mrb[0].mxu0
    %250 = vmatprep.mubr.bf16.mxu0 0
    %251 = vmatmul.mubr.bf16.gmra.mrb[0].mxu0 %v117
    %v252 = vpop.f32.mrb[0].mxu0
    %v253 = vadd.f32 %v152, %v252
    %v254 = vpop.f32.mrb[0].mxu0
    %v255 = vpop.f32.mrb[0].mxu0
    %v256 = vadd.f32 %v152, %v255
    %v257 = vpop.f32.mrb[0].mxu0
    %258 = vmatprep.mubr.bf16.mxu0 0
    %259 = vmatmul.mubr.bf16.gmra.mrb[0].mxu0 %v118
    %v260 = vpop.f32.mrb[0].mxu0
    %v261 = vadd.f32 %v152, %v260
    %v262 = vpop.f32.mrb[0].mxu0
    %v263 = vpop.f32.mrb[0].mxu0
    %v264 = vadd.f32 %v152, %v263
    %v265 = vpop.f32.mrb[0].mxu0
    %266 = vmatprep.mubr.bf16.mxu0 0
    %267 = vmatmul.mubr.bf16.gmra.mrb[0].mxu0 %v119
    %v268 = vpop.f32.mrb[0].mxu0
    %v269 = vadd.f32 %v152, %v268
    %v270 = vpop.f32.mrb[0].mxu0
    %v271 = vpop.f32.mrb[0].mxu0
    %v272 = vadd.f32 %v152, %v271
    %v273 = vpop.f32.mrb[0].mxu0
    %274 = vmatprep.mubr.bf16.mxu0 0
    %275 = vmatmul.mubr.bf16.gmra.mrb[0].mxu0 %v120
    %v276 = vpop.f32.mrb[0].mxu0
    %v277 = vadd.f32 %v152, %v276
    %v278 = vpop.f32.mrb[0].mxu0
    %v279 = vpop.f32.mrb[0].mxu0
    %v280 = vadd.f32 %v152, %v279
    %v281 = vpop.f32.mrb[0].mxu0
    %282 = vmatprep.mubr.bf16.mxu0 0
    %283 = vmatmul.mubr.bf16.gmra.mrb[0].mxu0 %v121
    %v284 = vpop.f32.mrb[0].mxu0
    %v285 = vadd.f32 %v152, %v284
    %v286 = vpop.f32.mrb[0].mxu0
    %v287 = vpop.f32.mrb[0].mxu0
    %v288 = vadd.f32 %v152, %v287
    %v289 = vpop.f32.mrb[0].mxu0
    %290 = vmatprep.mubr.bf16.mxu0 0
    %291 = vmatmul.mubr.bf16.gmra.mrb[0].mxu0 %v122
    %v292 = vpop.f32.mrb[0].mxu0
    %v293 = vadd.f32 %v152, %v292
    %v294 = vpop.f32.mrb[0].mxu0
    %v295 = vpop.f32.mrb[0].mxu0
    %v296 = vadd.f32 %v152, %v295
    %v297 = vpop.f32.mrb[0].mxu0
    %298 = vmatprep.mubr.bf16.mxu0 0
    %299 = vmatmul.mubr.bf16.gmra.mrb[0].mxu0 %v123
    %v300 = vpop.f32.mrb[0].mxu0
    %v301 = vadd.f32 %v152, %v300
    %v302 = vpop.f32.mrb[0].mxu0
    %v303 = vpop.f32.mrb[0].mxu0
    %v304 = vadd.f32 %v152, %v303
    %v305 = vpop.f32.mrb[0].mxu0
    %306 = vmatprep.mubr.bf16.mxu0 0
    %307 = vmatmul.mubr.bf16.gmra.mrb[0].mxu0 %v124
    %v308 = vpop.f32.mrb[0].mxu0
    %v309 = vadd.f32 %v152, %v308
    %v310 = vpop.f32.mrb[0].mxu0
    %v311 = vpop.f32.mrb[0].mxu0
    %v312 = vadd.f32 %v152, %v311
    %v313 = vpop.f32.mrb[0].mxu0
    %314 = vmatprep.mubr.bf16.mxu0 0
    %315 = vmatmul.mubr.bf16.gmra.mrb[0].mxu0 %v125
    %v316 = vpop.f32.mrb[0].mxu0
    %v317 = vadd.f32 %v152, %v316
    %v318 = vpop.f32.mrb[0].mxu0
    %v319 = vpop.f32.mrb[0].mxu0
    %v320 = vadd.f32 %v152, %v319
    %v321 = vpop.f32.mrb[0].mxu0
    %322 = vmatprep.mubr.bf16.mxu0 0
    %323 = vmatmul.mubr.bf16.gmra.mrb[0].mxu0 %v126
    %v324 = vpop.f32.mrb[0].mxu0
    %v325 = vadd.f32 %v152, %v324
    %v326 = vpop.f32.mrb[0].mxu0
    %v327 = vpop.f32.mrb[0].mxu0
    %v328 = vadd.f32 %v152, %v327
    %v329 = vpop.f32.mrb[0].mxu0
    %330 = vmatprep.mubr.bf16.mxu0 0
    %331 = vmatmul.mubr.bf16.gmra.mrb[0].mxu0 %v127
    %v332 = vpop.f32.mrb[0].mxu0
    %v333 = vadd.f32 %v152, %v332
    %v334 = vpop.f32.mrb[0].mxu0
    %v335 = vpop.f32.mrb[0].mxu0
    %v336 = vadd.f32 %v152, %v335
    %v337 = vpop.f32.mrb[0].mxu0
    %338 = vmatprep.mubr.bf16.mxu0 0
    %339 = vmatmul.mubr.bf16.gmra.mrb[0].mxu0 %v128
    %v340 = vpop.f32.mrb[0].mxu0
    %v341 = vadd.f32 %v152, %v340
    %v342 = vpop.f32.mrb[0].mxu0
    %v343 = vpop.f32.mrb[0].mxu0
    %v344 = vadd.f32 %v152, %v343
    %v345 = vpop.f32.mrb[0].mxu0
    %346 = vmatprep.mubr.bf16.mxu0 0
    %347 = vmatmul.mubr.bf16.gmra.mrb[0].mxu0 %v129
    %v348 = vpop.f32.mrb[0].mxu0
    %v349 = vadd.f32 %v152, %v348
    %v350 = vpop.f32.mrb[0].mxu0
    %v351 = vpop.f32.mrb[0].mxu0
    %v352 = vadd.f32 %v152, %v351
    %v353 = vpop.f32.mrb[0].mxu0
    %354 = vmatprep.mubr.bf16.mxu0 0
    %355 = vmatmul.mubr.bf16.gmra.mrb[0].mxu0 %v130
    %v356 = vpop.f32.mrb[0].mxu0
    %v357 = vadd.f32 %v152, %v356
    %v358 = vpop.f32.mrb[0].mxu0
    %v359 = vpop.f32.mrb[0].mxu0
    %v360 = vadd.f32 %v152, %v359
    %v361 = vpop.f32.mrb[0].mxu0
    %362 = vdwg.mxu0
    %v363 = vmul.f32 %v237, 0.5
    %v364 = vmul.f32 %v240, 0.5
    %v365 = vmul.f32 %v245, 0.5
    %v366 = vmul.f32 %v248, 0.5
    %v367 = vmul.f32 %v253, 0.5
    %v368 = vmul.f32 %v256, 0.5
    %v369 = vmul.f32 %v261, 0.5
    %v370 = vmul.f32 %v264, 0.5
    %v371 = vmul.f32 %v269, 0.5
    %v372 = vmul.f32 %v272, 0.5
    %v373 = vmul.f32 %v277, 0.5
    %v374 = vmul.f32 %v280, 0.5
    %v375 = vmul.f32 %v285, 0.5
    %v376 = vmul.f32 %v288, 0.5
    %v377 = vmul.f32 %v293, 0.5
    %v378 = vmul.f32 %v296, 0.5
    %v379 = vmul.f32 %v301, 0.5
    %v380 = vmul.f32 %v304, 0.5
    %v381 = vmul.f32 %v309, 0.5
    %v382 = vmul.f32 %v312, 0.5
    %v383 = vmul.f32 %v317, 0.5
    %v384 = vmul.f32 %v320, 0.5
    %v385 = vmul.f32 %v325, 0.5
    %v386 = vmul.f32 %v328, 0.5
    %v387 = vmul.f32 %v333, 0.5
    %v388 = vmul.f32 %v336, 0.5
    %v389 = vmul.f32 %v341, 0.5
    %v390 = vmul.f32 %v344, 0.5
    %v391 = vmul.f32 %v349, 0.5
    %v392 = vmul.f32 %v352, 0.5
    %v393 = vmul.f32 %v357, 0.5
    %v394 = vmul.f32 %v360, 0.5
    %v395 = vtanh.pop %v363
    %v396 = vtanh.pop %v364
    %v397 = vtanh.pop %v365
    %v398 = vtanh.pop %v366
    %v399 = vtanh.pop %v367
    %v400 = vtanh.pop %v368
    %v401 = vtanh.pop %v369
    %v402 = vtanh.pop %v370
    %v403 = vtanh.pop %v371
    %v404 = vtanh.pop %v372
    %v405 = vtanh.pop %v373
    %v406 = vtanh.pop %v374
    %v407 = vtanh.pop %v375
    %v408 = vtanh.pop %v376
    %v409 = vtanh.pop %v377
    %v410 = vtanh.pop %v378
    %v411 = vtanh.pop %v379
    %v412 = vtanh.pop %v380
    %v413 = vtanh.pop %v381
    %v414 = vtanh.pop %v382
    %v415 = vtanh.pop %v383
    %v416 = vtanh.pop %v384
    %v417 = vtanh.pop %v385
    %v418 = vtanh.pop %v386
    %v419 = vtanh.pop %v387
    %v420 = vtanh.pop %v388
    %v421 = vtanh.pop %v389
    %v422 = vtanh.pop %v390
    %v423 = vtanh.pop %v391
    %v424 = vtanh.pop %v392
    %v425 = vtanh.pop %v393
    %v426 = vtanh.pop %v394
    %v427 = vadd.f32 %v395, 1.0
    %v428 = vadd.f32 %v396, 1.0
    %v429 = vadd.f32 %v397, 1.0
    %v430 = vadd.f32 %v398, 1.0
    %v431 = vadd.f32 %v399, 1.0
    %v432 = vadd.f32 %v400, 1.0
    %v433 = vadd.f32 %v401, 1.0
    %v434 = vadd.f32 %v402, 1.0
    %v435 = vadd.f32 %v403, 1.0
    %v436 = vadd.f32 %v404, 1.0
    %v437 = vadd.f32 %v405, 1.0
    %v438 = vadd.f32 %v406, 1.0
    %v439 = vadd.f32 %v407, 1.0
    %v440 = vadd.f32 %v408, 1.0
    %v441 = vadd.f32 %v409, 1.0
    %v442 = vadd.f32 %v410, 1.0
    %v443 = vadd.f32 %v411, 1.0
    %v444 = vadd.f32 %v412, 1.0
    %v445 = vadd.f32 %v413, 1.0
    %v446 = vadd.f32 %v414, 1.0
    %v447 = vadd.f32 %v415, 1.0
    %v448 = vadd.f32 %v416, 1.0
    %v449 = vadd.f32 %v417, 1.0
    %v450 = vadd.f32 %v418, 1.0
    %v451 = vadd.f32 %v419, 1.0
    %v452 = vadd.f32 %v420, 1.0
    %v453 = vadd.f32 %v421, 1.0
    %v454 = vadd.f32 %v422, 1.0
    %v455 = vadd.f32 %v423, 1.0
    %v456 = vadd.f32 %v424, 1.0
    %v457 = vadd.f32 %v425, 1.0
    %v458 = vadd.f32 %v426, 1.0
    %v459 = vmul.f32 %v363, %v427
    %v460 = vmul.f32 %v364, %v428
    %v461 = vmul.f32 %v365, %v429
    %v462 = vmul.f32 %v366, %v430
    %v463 = vmul.f32 %v367, %v431
    %v464 = vmul.f32 %v368, %v432
    %v465 = vmul.f32 %v369, %v433
    %v466 = vmul.f32 %v370, %v434
    %v467 = vmul.f32 %v371, %v435
    %v468 = vmul.f32 %v372, %v436
    %v469 = vmul.f32 %v373, %v437
    %v470 = vmul.f32 %v374, %v438
    %v471 = vmul.f32 %v375, %v439
    %v472 = vmul.f32 %v376, %v440
    %v473 = vmul.f32 %v377, %v441
    %v474 = vmul.f32 %v378, %v442
    %v475 = vmul.f32 %v379, %v443
    %v476 = vmul.f32 %v380, %v444
    %v477 = vmul.f32 %v381, %v445
    %v478 = vmul.f32 %v382, %v446
    %v479 = vmul.f32 %v383, %v447
    %v480 = vmul.f32 %v384, %v448
    %v481 = vmul.f32 %v385, %v449
    %v482 = vmul.f32 %v386, %v450
    %v483 = vmul.f32 %v387, %v451
    %v484 = vmul.f32 %v388, %v452
    %v485 = vmul.f32 %v389, %v453
    %v486 = vmul.f32 %v390, %v454
    %v487 = vmul.f32 %v391, %v455
    %v488 = vmul.f32 %v392, %v456
    %v489 = vmul.f32 %v393, %v457
    %v490 = vmul.f32 %v394, %v458
    %v491 = vpack.c.bf16 %v460, %v459
    %v492 = vpack.c.bf16 %v462, %v461
    %v493 = vpack.c.bf16 %v464, %v463
    %v494 = vpack.c.bf16 %v466, %v465
    %v495 = vpack.c.bf16 %v468, %v467
    %v496 = vpack.c.bf16 %v470, %v469
    %v497 = vpack.c.bf16 %v472, %v471
    %v498 = vpack.c.bf16 %v474, %v473
    %v499 = vpack.c.bf16 %v476, %v475
    %v500 = vpack.c.bf16 %v478, %v477
    %v501 = vpack.c.bf16 %v480, %v479
    %v502 = vpack.c.bf16 %v482, %v481
    %v503 = vpack.c.bf16 %v484, %v483
    %v504 = vpack.c.bf16 %v486, %v485
    %v505 = vpack.c.bf16 %v488, %v487
    %v506 = vpack.c.bf16 %v490, %v489
    %v507 = vld [vmem:[#allocation7] sm:$0xf]
    %v508 = vld [vmem:[#allocation7 + $0x4] sm:$0xf]
    %v509 = vld [vmem:[#allocation7 + $0x8] sm:$0xf]
    %v510 = vld [vmem:[#allocation7 + $0xc] sm:$0xf]
    %v511 = vld [vmem:[#allocation7 + $0x10] sm:$0xf]
    %v512 = vld [vmem:[#allocation7 + $0x14] sm:$0xf]
    %v513 = vld [vmem:[#allocation7 + $0x18] sm:$0xf]
    %v514 = vld [vmem:[#allocation7 + $0x1c] sm:$0xf]
    %v515 = vld [vmem:[#allocation7 + $0x20] sm:$0xf]
    %v516 = vld [vmem:[#allocation7 + $0x24] sm:$0xf]
    %v517 = vld [vmem:[#allocation7 + $0x28] sm:$0xf]
    %v518 = vld [vmem:[#allocation7 + $0x2c] sm:$0xf]
    %v519 = vld [vmem:[#allocation7 + $0x30] sm:$0xf]
    %v520 = vld [vmem:[#allocation7 + $0x34] sm:$0xf]
    %v521 = vld [vmem:[#allocation7 + $0x38] sm:$0xf]
    %v522 = vld [vmem:[#allocation7 + $0x3c] sm:$0xf]
    %v523 = vld [vmem:[%s4] sm:$0x1]
    %v525 = vlaneseq
    %v526 = vshrl.u32 %v525, 7
    %v527 = vsub.s32 0, %v526
    %v528 = vrot.slane %v523, %v527
    %v546 = vunpack.c.l.b16 %v507
    %v547 = vunpack.c.l.b16 %v508
    %v548 = vunpack.c.l.b16 %v509
    %v549 = vunpack.c.l.b16 %v510
    %v550 = vunpack.c.l.b16 %v511
    %v551 = vunpack.c.l.b16 %v512
    %v552 = vunpack.c.l.b16 %v513
    %v553 = vunpack.c.l.b16 %v514
    %v554 = vunpack.c.l.b16 %v515
    %v555 = vunpack.c.l.b16 %v516
    %v556 = vunpack.c.l.b16 %v517
    %v557 = vunpack.c.l.b16 %v518
    %v558 = vunpack.c.l.b16 %v519
    %v559 = vunpack.c.l.b16 %v520
    %v560 = vunpack.c.l.b16 %v521
    %v561 = vunpack.c.l.b16 %v522
    %v562 = vpack.c.b16 %v547, %v546
    %v563 = vpack.c.b16 %v549, %v548
    %v564 = vpack.c.b16 %v551, %v550
    %v565 = vpack.c.b16 %v553, %v552
    %v566 = vpack.c.b16 %v555, %v554
    %v567 = vpack.c.b16 %v557, %v556
    %v568 = vpack.c.b16 %v559, %v558
    %v569 = vpack.c.b16 %v561, %v560
    %578 = vmatprep.subr.bf16.mxu0 0
    %579 = vmatpush1.bf16.msra.mxu0 %v562
    %580 = vmatprep.subr.bf16.mxu0 0
    %581 = vmatpush1.bf16.msra.mxu0 %v563
    %582 = vmatprep.subr.bf16.mxu0 0
    %583 = vmatpush1.bf16.msra.mxu0 %v564
    %584 = vmatprep.subr.bf16.mxu0 0
    %585 = vmatpush1.bf16.msra.mxu0 %v565
    %586 = vmatprep.subr.bf16.mxu0 0
    %587 = vmatpush1.bf16.msra.mxu0 %v566
    %588 = vmatprep.subr.bf16.mxu0 0
    %589 = vmatpush1.bf16.msra.mxu0 %v567
    %590 = vmatprep.subr.bf16.mxu0 0
    %591 = vmatpush1.bf16.msra.mxu0 %v568
    %592 = vmatprep.subr.bf16.mxu0 0
    %593 = vmatpush1.bf16.msra.mxu0 %v569
    %594 = vmatprep.subr.bf16.mxu0 0
    %595 = vmatpush1.bf16.msra.mxu0 0
    %596 = vmatprep.subr.bf16.mxu0 0
    %597 = vmatpush1.bf16.msra.mxu0 0
    %598 = vmatprep.subr.bf16.mxu0 0
    %599 = vmatpush1.bf16.msra.mxu0 0
    %600 = vmatprep.subr.bf16.mxu0 0
    %601 = vmatpush1.bf16.msra.mxu0 0
    %602 = vmatprep.subr.bf16.mxu0 0
    %603 = vmatpush1.bf16.msra.mxu0 0
    %604 = vmatprep.subr.bf16.mxu0 0
    %605 = vmatpush1.bf16.msra.mxu0 0
    %606 = vmatprep.subr.bf16.mxu0 0
    %607 = vmatpush1.bf16.msra.mxu0 0
    %608 = vmatprep.subr.bf16.mxu0 0
    %609 = vmatpush1.bf16.msra.mxu0 0
    %610 = vmatprep.mubr.bf16.mxu0 0
    %611 = vmatmul.mubr.bf16.gmra.mrb[0].mxu0 %v491
    %v612 = vpop.f32.mrb[0].mxu0
    %v613 = vadd.f32 %v528, %v612
    %v614 = vpop.f32.mrb[0].mxu0
    %v615 = vpop.f32.mrb[0].mxu0
    %v616 = vadd.f32 %v528, %v615
    %v617 = vpop.f32.mrb[0].mxu0
    %618 = vmatprep.mubr.bf16.mxu0 0
    %619 = vmatmul.mubr.bf16.gmra.mrb[0].mxu0 %v492
    %v620 = vpop.f32.mrb[0].mxu0
    %v621 = vadd.f32 %v528, %v620
    %v622 = vpop.f32.mrb[0].mxu0
    %v623 = vpop.f32.mrb[0].mxu0
    %v624 = vadd.f32 %v528, %v623
    %v625 = vpop.f32.mrb[0].mxu0
    %626 = vmatprep.mubr.bf16.mxu0 0
    %627 = vmatmul.mubr.bf16.gmra.mrb[0].mxu0 %v493
    %v628 = vpop.f32.mrb[0].mxu0
    %v629 = vadd.f32 %v528, %v628
    %v630 = vpop.f32.mrb[0].mxu0
    %v631 = vpop.f32.mrb[0].mxu0
    %v632 = vadd.f32 %v528, %v631
    %v633 = vpop.f32.mrb[0].mxu0
    %634 = vmatprep.mubr.bf16.mxu0 0
    %635 = vmatmul.mubr.bf16.gmra.mrb[0].mxu0 %v494
    %v636 = vpop.f32.mrb[0].mxu0
    %v637 = vadd.f32 %v528, %v636
    %v638 = vpop.f32.mrb[0].mxu0
    %v639 = vpop.f32.mrb[0].mxu0
    %v640 = vadd.f32 %v528, %v639
    %v641 = vpop.f32.mrb[0].mxu0
    %642 = vmatprep.mubr.bf16.mxu0 0
    %643 = vmatmul.mubr.bf16.gmra.mrb[0].mxu0 %v495
    %v644 = vpop.f32.mrb[0].mxu0
    %v645 = vadd.f32 %v528, %v644
    %v646 = vpop.f32.mrb[0].mxu0
    %v647 = vpop.f32.mrb[0].mxu0
    %v648 = vadd.f32 %v528, %v647
    %v649 = vpop.f32.mrb[0].mxu0
    %650 = vmatprep.mubr.bf16.mxu0 0
    %651 = vmatmul.mubr.bf16.gmra.mrb[0].mxu0 %v496
    %v652 = vpop.f32.mrb[0].mxu0
    %v653 = vadd.f32 %v528, %v652
    %v654 = vpop.f32.mrb[0].mxu0
    %v655 = vpop.f32.mrb[0].mxu0
    %v656 = vadd.f32 %v528, %v655
    %v657 = vpop.f32.mrb[0].mxu0
    %658 = vmatprep.mubr.bf16.mxu0 0
    %659 = vmatmul.mubr.bf16.gmra.mrb[0].mxu0 %v497
    %v660 = vpop.f32.mrb[0].mxu0
    %v661 = vadd.f32 %v528, %v660
    %v662 = vpop.f32.mrb[0].mxu0
    %v663 = vpop.f32.mrb[0].mxu0
    %v664 = vadd.f32 %v528, %v663
    %v665 = vpop.f32.mrb[0].mxu0
    %666 = vmatprep.mubr.bf16.mxu0 0
    %667 = vmatmul.mubr.bf16.gmra.mrb[0].mxu0 %v498
    %v668 = vpop.f32.mrb[0].mxu0
    %v669 = vadd.f32 %v528, %v668
    %v670 = vpop.f32.mrb[0].mxu0
    %v671 = vpop.f32.mrb[0].mxu0
    %v672 = vadd.f32 %v528, %v671
    %v673 = vpop.f32.mrb[0].mxu0
    %674 = vmatprep.mubr.bf16.mxu0 0
    %675 = vmatmul.mubr.bf16.gmra.mrb[0].mxu0 %v499
    %v676 = vpop.f32.mrb[0].mxu0
    %v677 = vadd.f32 %v528, %v676
    %v678 = vpop.f32.mrb[0].mxu0
    %v679 = vpop.f32.mrb[0].mxu0
    %v680 = vadd.f32 %v528, %v679
    %v681 = vpop.f32.mrb[0].mxu0
    %682 = vmatprep.mubr.bf16.mxu0 0
    %683 = vmatmul.mubr.bf16.gmra.mrb[0].mxu0 %v500
    %v684 = vpop.f32.mrb[0].mxu0
    %v685 = vadd.f32 %v528, %v684
    %v686 = vpop.f32.mrb[0].mxu0
    %v687 = vpop.f32.mrb[0].mxu0
    %v688 = vadd.f32 %v528, %v687
    %v689 = vpop.f32.mrb[0].mxu0
    %690 = vmatprep.mubr.bf16.mxu0 0
    %691 = vmatmul.mubr.bf16.gmra.mrb[0].mxu0 %v501
    %v692 = vpop.f32.mrb[0].mxu0
    %v693 = vadd.f32 %v528, %v692
    %v694 = vpop.f32.mrb[0].mxu0
    %v695 = vpop.f32.mrb[0].mxu0
    %v696 = vadd.f32 %v528, %v695
    %v697 = vpop.f32.mrb[0].mxu0
    %698 = vmatprep.mubr.bf16.mxu0 0
    %699 = vmatmul.mubr.bf16.gmra.mrb[0].mxu0 %v502
    %v700 = vpop.f32.mrb[0].mxu0
    %v701 = vadd.f32 %v528, %v700
    %v702 = vpop.f32.mrb[0].mxu0
    %v703 = vpop.f32.mrb[0].mxu0
    %v704 = vadd.f32 %v528, %v703
    %v705 = vpop.f32.mrb[0].mxu0
    %706 = vmatprep.mubr.bf16.mxu0 0
    %707 = vmatmul.mubr.bf16.gmra.mrb[0].mxu0 %v503
    %v708 = vpop.f32.mrb[0].mxu0
    %v709 = vadd.f32 %v528, %v708
    %v710 = vpop.f32.mrb[0].mxu0
    %v711 = vpop.f32.mrb[0].mxu0
    %v712 = vadd.f32 %v528, %v711
    %v713 = vpop.f32.mrb[0].mxu0
    %714 = vmatprep.mubr.bf16.mxu0 0
    %715 = vmatmul.mubr.bf16.gmra.mrb[0].mxu0 %v504
    %v716 = vpop.f32.mrb[0].mxu0
    %v717 = vadd.f32 %v528, %v716
    %v718 = vpop.f32.mrb[0].mxu0
    %v719 = vpop.f32.mrb[0].mxu0
    %v720 = vadd.f32 %v528, %v719
    %v721 = vpop.f32.mrb[0].mxu0
    %722 = vmatprep.mubr.bf16.mxu0 0
    %723 = vmatmul.mubr.bf16.gmra.mrb[0].mxu0 %v505
    %v724 = vpop.f32.mrb[0].mxu0
    %v725 = vadd.f32 %v528, %v724
    %v726 = vpop.f32.mrb[0].mxu0
    %v727 = vpop.f32.mrb[0].mxu0
    %v728 = vadd.f32 %v528, %v727
    %v729 = vpop.f32.mrb[0].mxu0
    %730 = vmatprep.mubr.bf16.mxu0 0
    %731 = vmatmul.mubr.bf16.gmra.mrb[0].mxu0 %v506
    %v732 = vpop.f32.mrb[0].mxu0
    %v733 = vadd.f32 %v528, %v732
    %v734 = vpop.f32.mrb[0].mxu0
    %v735 = vpop.f32.mrb[0].mxu0
    %v736 = vadd.f32 %v528, %v735
    %v737 = vpop.f32.mrb[0].mxu0
    %738 = vdwg.mxu0
    %v739 = vmul.f32 %v613, 0.5
    %v740 = vmul.f32 %v616, 0.5
    %v741 = vmul.f32 %v621, 0.5
    %v742 = vmul.f32 %v624, 0.5
    %v743 = vmul.f32 %v629, 0.5
    %v744 = vmul.f32 %v632, 0.5
    %v745 = vmul.f32 %v637, 0.5
    %v746 = vmul.f32 %v640, 0.5
    %v747 = vmul.f32 %v645, 0.5
    %v748 = vmul.f32 %v648, 0.5
    %v749 = vmul.f32 %v653, 0.5
    %v750 = vmul.f32 %v656, 0.5
    %v751 = vmul.f32 %v661, 0.5
    %v752 = vmul.f32 %v664, 0.5
    %v753 = vmul.f32 %v669, 0.5
    %v754 = vmul.f32 %v672, 0.5
    %v755 = vmul.f32 %v677, 0.5
    %v756 = vmul.f32 %v680, 0.5
    %v757 = vmul.f32 %v685, 0.5
    %v758 = vmul.f32 %v688, 0.5
    %v759 = vmul.f32 %v693, 0.5
    %v760 = vmul.f32 %v696, 0.5
    %v761 = vmul.f32 %v701, 0.5
    %v762 = vmul.f32 %v704, 0.5
    %v763 = vmul.f32 %v709, 0.5
    %v764 = vmul.f32 %v712, 0.5
    %v765 = vmul.f32 %v717, 0.5
    %v766 = vmul.f32 %v720, 0.5
    %v767 = vmul.f32 %v725, 0.5
    %v768 = vmul.f32 %v728, 0.5
    %v769 = vmul.f32 %v733, 0.5
    %v770 = vmul.f32 %v736, 0.5
    %v771 = vtanh.pop %v739
    %v772 = vtanh.pop %v740
    %v773 = vtanh.pop %v741
    %v774 = vtanh.pop %v742
    %v775 = vtanh.pop %v743
    %v776 = vtanh.pop %v744
    %v777 = vtanh.pop %v745
    %v778 = vtanh.pop %v746
    %v779 = vtanh.pop %v747
    %v780 = vtanh.pop %v748
    %v781 = vtanh.pop %v749
    %v782 = vtanh.pop %v750
    %v783 = vtanh.pop %v751
    %v784 = vtanh.pop %v752
    %v785 = vtanh.pop %v753
    %v786 = vtanh.pop %v754
    %v787 = vtanh.pop %v755
    %v788 = vtanh.pop %v756
    %v789 = vtanh.pop %v757
    %v790 = vtanh.pop %v758
    %v791 = vtanh.pop %v759
    %v792 = vtanh.pop %v760
    %v793 = vtanh.pop %v761
    %v794 = vtanh.pop %v762
    %v795 = vtanh.pop %v763
    %v796 = vtanh.pop %v764
    %v797 = vtanh.pop %v765
    %v798 = vtanh.pop %v766
    %v799 = vtanh.pop %v767
    %v800 = vtanh.pop %v768
    %v801 = vtanh.pop %v769
    %v802 = vtanh.pop %v770
    %v803 = vadd.f32 %v771, 1.0
    %v804 = vadd.f32 %v772, 1.0
    %v805 = vadd.f32 %v773, 1.0
    %v806 = vadd.f32 %v774, 1.0
    %v807 = vadd.f32 %v775, 1.0
    %v808 = vadd.f32 %v776, 1.0
    %v809 = vadd.f32 %v777, 1.0
    %v810 = vadd.f32 %v778, 1.0
    %v811 = vadd.f32 %v779, 1.0
    %v812 = vadd.f32 %v780, 1.0
    %v813 = vadd.f32 %v781, 1.0
    %v814 = vadd.f32 %v782, 1.0
    %v815 = vadd.f32 %v783, 1.0
    %v816 = vadd.f32 %v784, 1.0
    %v817 = vadd.f32 %v785, 1.0
    %v818 = vadd.f32 %v786, 1.0
    %v819 = vadd.f32 %v787, 1.0
    %v820 = vadd.f32 %v788, 1.0
    %v821 = vadd.f32 %v789, 1.0
    %v822 = vadd.f32 %v790, 1.0
    %v823 = vadd.f32 %v791, 1.0
    %v824 = vadd.f32 %v792, 1.0
    %v825 = vadd.f32 %v793, 1.0
    %v826 = vadd.f32 %v794, 1.0
    %v827 = vadd.f32 %v795, 1.0
    %v828 = vadd.f32 %v796, 1.0
    %v829 = vadd.f32 %v797, 1.0
    %v830 = vadd.f32 %v798, 1.0
    %v831 = vadd.f32 %v799, 1.0
    %v832 = vadd.f32 %v800, 1.0
    %v833 = vadd.f32 %v801, 1.0
    %v834 = vadd.f32 %v802, 1.0
    %v835 = vmul.f32 %v739, %v803
    %v836 = vmul.f32 %v740, %v804
    %v837 = vmul.f32 %v741, %v805
    %v838 = vmul.f32 %v742, %v806
    %v839 = vmul.f32 %v743, %v807
    %v840 = vmul.f32 %v744, %v808
    %v841 = vmul.f32 %v745, %v809
    %v842 = vmul.f32 %v746, %v810
    %v843 = vmul.f32 %v747, %v811
    %v844 = vmul.f32 %v748, %v812
    %v845 = vmul.f32 %v749, %v813
    %v846 = vmul.f32 %v750, %v814
    %v847 = vmul.f32 %v751, %v815
    %v848 = vmul.f32 %v752, %v816
    %v849 = vmul.f32 %v753, %v817
    %v850 = vmul.f32 %v754, %v818
    %v851 = vmul.f32 %v755, %v819
    %v852 = vmul.f32 %v756, %v820
    %v853 = vmul.f32 %v757, %v821
    %v854 = vmul.f32 %v758, %v822
    %v855 = vmul.f32 %v759, %v823
    %v856 = vmul.f32 %v760, %v824
    %v857 = vmul.f32 %v761, %v825
    %v858 = vmul.f32 %v762, %v826
    %v859 = vmul.f32 %v763, %v827
    %v860 = vmul.f32 %v764, %v828
    %v861 = vmul.f32 %v765, %v829
    %v862 = vmul.f32 %v766, %v830
    %v863 = vmul.f32 %v767, %v831
    %v864 = vmul.f32 %v768, %v832
    %v865 = vmul.f32 %v769, %v833
    %v866 = vmul.f32 %v770, %v834
    %v867 = vpack.c.bf16 %v836, %v835
    %v868 = vpack.c.bf16 %v838, %v837
    %v869 = vpack.c.bf16 %v840, %v839
    %v870 = vpack.c.bf16 %v842, %v841
    %v871 = vpack.c.bf16 %v844, %v843
    %v872 = vpack.c.bf16 %v846, %v845
    %v873 = vpack.c.bf16 %v848, %v847
    %v874 = vpack.c.bf16 %v850, %v849
    %v875 = vpack.c.bf16 %v852, %v851
    %v876 = vpack.c.bf16 %v854, %v853
    %v877 = vpack.c.bf16 %v856, %v855
    %v878 = vpack.c.bf16 %v858, %v857
    %v879 = vpack.c.bf16 %v860, %v859
    %v880 = vpack.c.bf16 %v862, %v861
    %v881 = vpack.c.bf16 %v864, %v863
    %v882 = vpack.c.bf16 %v866, %v865
    %v883 = vld [vmem:[#allocation8] sm:$0xf]
    %v884 = vld [vmem:[#allocation8 + $0x4] sm:$0xf]
    %v885 = vld [vmem:[#allocation8 + $0x8] sm:$0xf]
    %v886 = vld [vmem:[#allocation8 + $0xc] sm:$0xf]
    %v887 = vld [vmem:[#allocation8 + $0x10] sm:$0xf]
    %v888 = vld [vmem:[#allocation8 + $0x14] sm:$0xf]
    %v889 = vld [vmem:[#allocation8 + $0x18] sm:$0xf]
    %v890 = vld [vmem:[#allocation8 + $0x1c] sm:$0xf]
    %v891 = vld [vmem:[#allocation8 + $0x20] sm:$0xf]
    %v892 = vld [vmem:[#allocation8 + $0x24] sm:$0xf]
    %v893 = vld [vmem:[#allocation8 + $0x28] sm:$0xf]
    %v894 = vld [vmem:[#allocation8 + $0x2c] sm:$0xf]
    %v895 = vld [vmem:[#allocation8 + $0x30] sm:$0xf]
    %v896 = vld [vmem:[#allocation8 + $0x34] sm:$0xf]
    %v897 = vld [vmem:[#allocation8 + $0x38] sm:$0xf]
    %v898 = vld [vmem:[#allocation8 + $0x3c] sm:$0xf]
    %v899 = vld [vmem:[%s6] sm:$0x1]
    %v901 = vlaneseq
    %v902 = vshrl.u32 %v901, 7
    %v903 = vsub.s32 0, %v902
    %v904 = vrot.slane %v899, %v903
    %v922 = vunpack.c.l.b16 %v883
    %v923 = vunpack.c.l.b16 %v884
    %v924 = vunpack.c.l.b16 %v885
    %v925 = vunpack.c.l.b16 %v886
    %v926 = vunpack.c.l.b16 %v887
    %v927 = vunpack.c.l.b16 %v888
    %v928 = vunpack.c.l.b16 %v889
    %v929 = vunpack.c.l.b16 %v890
    %v930 = vunpack.c.l.b16 %v891
    %v931 = vunpack.c.l.b16 %v892
    %v932 = vunpack.c.l.b16 %v893
    %v933 = vunpack.c.l.b16 %v894
    %v934 = vunpack.c.l.b16 %v895
    %v935 = vunpack.c.l.b16 %v896
    %v936 = vunpack.c.l.b16 %v897
    %v937 = vunpack.c.l.b16 %v898
    %v938 = vpack.c.b16 %v923, %v922
    %v939 = vpack.c.b16 %v925, %v924
    %v940 = vpack.c.b16 %v927, %v926
    %v941 = vpack.c.b16 %v929, %v928
    %v942 = vpack.c.b16 %v931, %v930
    %v943 = vpack.c.b16 %v933, %v932
    %v944 = vpack.c.b16 %v935, %v934
    %v945 = vpack.c.b16 %v937, %v936
    %954 = vmatprep.subr.bf16.mxu0 0
    %955 = vmatpush1.bf16.msra.mxu0 %v938
    %956 = vmatprep.subr.bf16.mxu0 0
    %957 = vmatpush1.bf16.msra.mxu0 %v939
    %958 = vmatprep.subr.bf16.mxu0 0
    %959 = vmatpush1.bf16.msra.mxu0 %v940
    %960 = vmatprep.subr.bf16.mxu0 0
    %961 = vmatpush1.bf16.msra.mxu0 %v941
    %962 = vmatprep.subr.bf16.mxu0 0
    %963 = vmatpush1.bf16.msra.mxu0 %v942
    %964 = vmatprep.subr.bf16.mxu0 0
    %965 = vmatpush1.bf16.msra.mxu0 %v943
    %966 = vmatprep.subr.bf16.mxu0 0
    %967 = vmatpush1.bf16.msra.mxu0 %v944
    %968 = vmatprep.subr.bf16.mxu0 0
    %969 = vmatpush1.bf16.msra.mxu0 %v945
    %970 = vmatprep.subr.bf16.mxu0 0
    %971 = vmatpush1.bf16.msra.mxu0 0
    %972 = vmatprep.subr.bf16.mxu0 0
    %973 = vmatpush1.bf16.msra.mxu0 0
    %974 = vmatprep.subr.bf16.mxu0 0
    %975 = vmatpush1.bf16.msra.mxu0 0
    %976 = vmatprep.subr.bf16.mxu0 0
    %977 = vmatpush1.bf16.msra.mxu0 0
    %978 = vmatprep.subr.bf16.mxu0 0
    %979 = vmatpush1.bf16.msra.mxu0 0
    %980 = vmatprep.subr.bf16.mxu0 0
    %981 = vmatpush1.bf16.msra.mxu0 0
    %982 = vmatprep.subr.bf16.mxu0 0
    %983 = vmatpush1.bf16.msra.mxu0 0
    %984 = vmatprep.subr.bf16.mxu0 0
    %985 = vmatpush1.bf16.msra.mxu0 0
    %986 = vmatprep.mubr.bf16.mxu0 0
    %987 = vmatmul.mubr.bf16.gmra.mrb[0].mxu0 %v867
    %v988 = vpop.f32.mrb[0].mxu0
    %v989 = vadd.f32 %v904, %v988
    %v990 = vpop.f32.mrb[0].mxu0
    %v991 = vpop.f32.mrb[0].mxu0
    %v992 = vadd.f32 %v904, %v991
    %v993 = vpop.f32.mrb[0].mxu0
    %994 = vmatprep.mubr.bf16.mxu0 0
    %995 = vmatmul.mubr.bf16.gmra.mrb[0].mxu0 %v868
    %v996 = vpop.f32.mrb[0].mxu0
    %v997 = vadd.f32 %v904, %v996
    %v998 = vpop.f32.mrb[0].mxu0
    %v999 = vpop.f32.mrb[0].mxu0
    %v1000 = vadd.f32 %v904, %v999
    %v1001 = vpop.f32.mrb[0].mxu0
    %1002 = vmatprep.mubr.bf16.mxu0 0
    %1003 = vmatmul.mubr.bf16.gmra.mrb[0].mxu0 %v869
    %v1004 = vpop.f32.mrb[0].mxu0
    %v1005 = vadd.f32 %v904, %v1004
    %v1006 = vpop.f32.mrb[0].mxu0
    %v1007 = vpop.f32.mrb[0].mxu0
    %v1008 = vadd.f32 %v904, %v1007
    %v1009 = vpop.f32.mrb[0].mxu0
    %1010 = vmatprep.mubr.bf16.mxu0 0
    %1011 = vmatmul.mubr.bf16.gmra.mrb[0].mxu0 %v870
    %v1012 = vpop.f32.mrb[0].mxu0
    %v1013 = vadd.f32 %v904, %v1012
    %v1014 = vpop.f32.mrb[0].mxu0
    %v1015 = vpop.f32.mrb[0].mxu0
    %v1016 = vadd.f32 %v904, %v1015
    %v1017 = vpop.f32.mrb[0].mxu0
    %1018 = vmatprep.mubr.bf16.mxu0 0
    %1019 = vmatmul.mubr.bf16.gmra.mrb[0].mxu0 %v871
    %v1020 = vpop.f32.mrb[0].mxu0
    %v1021 = vadd.f32 %v904, %v1020
    %v1022 = vpop.f32.mrb[0].mxu0
    %v1023 = vpop.f32.mrb[0].mxu0
    %v1024 = vadd.f32 %v904, %v1023
    %v1025 = vpop.f32.mrb[0].mxu0
    %1026 = vmatprep.mubr.bf16.mxu0 0
    %1027 = vmatmul.mubr.bf16.gmra.mrb[0].mxu0 %v872
    %v1028 = vpop.f32.mrb[0].mxu0
    %v1029 = vadd.f32 %v904, %v1028
    %v1030 = vpop.f32.mrb[0].mxu0
    %v1031 = vpop.f32.mrb[0].mxu0
    %v1032 = vadd.f32 %v904, %v1031
    %v1033 = vpop.f32.mrb[0].mxu0
    %1034 = vmatprep.mubr.bf16.mxu0 0
    %1035 = vmatmul.mubr.bf16.gmra.mrb[0].mxu0 %v873
    %v1036 = vpop.f32.mrb[0].mxu0
    %v1037 = vadd.f32 %v904, %v1036
    %v1038 = vpop.f32.mrb[0].mxu0
    %v1039 = vpop.f32.mrb[0].mxu0
    %v1040 = vadd.f32 %v904, %v1039
    %v1041 = vpop.f32.mrb[0].mxu0
    %1042 = vmatprep.mubr.bf16.mxu0 0
    %1043 = vmatmul.mubr.bf16.gmra.mrb[0].mxu0 %v874
    %v1044 = vpop.f32.mrb[0].mxu0
    %v1045 = vadd.f32 %v904, %v1044
    %v1046 = vpop.f32.mrb[0].mxu0
    %v1047 = vpop.f32.mrb[0].mxu0
    %v1048 = vadd.f32 %v904, %v1047
    %v1049 = vpop.f32.mrb[0].mxu0
    %1050 = vmatprep.mubr.bf16.mxu0 0
    %1051 = vmatmul.mubr.bf16.gmra.mrb[0].mxu0 %v875
    %v1052 = vpop.f32.mrb[0].mxu0
    %v1053 = vadd.f32 %v904, %v1052
    %v1054 = vpop.f32.mrb[0].mxu0
    %v1055 = vpop.f32.mrb[0].mxu0
    %v1056 = vadd.f32 %v904, %v1055
    %v1057 = vpop.f32.mrb[0].mxu0
    %1058 = vmatprep.mubr.bf16.mxu0 0
    %1059 = vmatmul.mubr.bf16.gmra.mrb[0].mxu0 %v876
    %v1060 = vpop.f32.mrb[0].mxu0
    %v1061 = vadd.f32 %v904, %v1060
    %v1062 = vpop.f32.mrb[0].mxu0
    %v1063 = vpop.f32.mrb[0].mxu0
    %v1064 = vadd.f32 %v904, %v1063
    %v1065 = vpop.f32.mrb[0].mxu0
    %1066 = vmatprep.mubr.bf16.mxu0 0
    %1067 = vmatmul.mubr.bf16.gmra.mrb[0].mxu0 %v877
    %v1068 = vpop.f32.mrb[0].mxu0
    %v1069 = vadd.f32 %v904, %v1068
    %v1070 = vpop.f32.mrb[0].mxu0
    %v1071 = vpop.f32.mrb[0].mxu0
    %v1072 = vadd.f32 %v904, %v1071
    %v1073 = vpop.f32.mrb[0].mxu0
    %1074 = vmatprep.mubr.bf16.mxu0 0
    %1075 = vmatmul.mubr.bf16.gmra.mrb[0].mxu0 %v878
    %v1076 = vpop.f32.mrb[0].mxu0
    %v1077 = vadd.f32 %v904, %v1076
    %v1078 = vpop.f32.mrb[0].mxu0
    %v1079 = vpop.f32.mrb[0].mxu0
    %v1080 = vadd.f32 %v904, %v1079
    %v1081 = vpop.f32.mrb[0].mxu0
    %1082 = vmatprep.mubr.bf16.mxu0 0
    %1083 = vmatmul.mubr.bf16.gmra.mrb[0].mxu0 %v879
    %v1084 = vpop.f32.mrb[0].mxu0
    %v1085 = vadd.f32 %v904, %v1084
    %v1086 = vpop.f32.mrb[0].mxu0
    %v1087 = vpop.f32.mrb[0].mxu0
    %v1088 = vadd.f32 %v904, %v1087
    %v1089 = vpop.f32.mrb[0].mxu0
    %1090 = vmatprep.mubr.bf16.mxu0 0
    %1091 = vmatmul.mubr.bf16.gmra.mrb[0].mxu0 %v880
    %v1092 = vpop.f32.mrb[0].mxu0
    %v1093 = vadd.f32 %v904, %v1092
    %v1094 = vpop.f32.mrb[0].mxu0
    %v1095 = vpop.f32.mrb[0].mxu0
    %v1096 = vadd.f32 %v904, %v1095
    %v1097 = vpop.f32.mrb[0].mxu0
    %1098 = vmatprep.mubr.bf16.mxu0 0
    %1099 = vmatmul.mubr.bf16.gmra.mrb[0].mxu0 %v881
    %v1100 = vpop.f32.mrb[0].mxu0
    %v1101 = vadd.f32 %v904, %v1100
    %v1102 = vpop.f32.mrb[0].mxu0
    %v1103 = vpop.f32.mrb[0].mxu0
    %v1104 = vadd.f32 %v904, %v1103
    %v1105 = vpop.f32.mrb[0].mxu0
    %1106 = vmatprep.mubr.bf16.mxu0 0
    %1107 = vmatmul.mubr.bf16.gmra.mrb[0].mxu0 %v882
    %v1108 = vpop.f32.mrb[0].mxu0
    %v1109 = vadd.f32 %v904, %v1108
    %v1110 = vpop.f32.mrb[0].mxu0
    %v1111 = vpop.f32.mrb[0].mxu0
    %v1112 = vadd.f32 %v904, %v1111
    %v1113 = vpop.f32.mrb[0].mxu0
    %1114 = vdwg.mxu0
    %1115 = vst [vmem:[#allocation10] sm:$0xff] %v989
    %1116 = vst [vmem:[#allocation10 + $0x8] sm:$0xff] %v992
    %1117 = vst [vmem:[#allocation10 + $0x10] sm:$0xff] %v997
    %1118 = vst [vmem:[#allocation10 + $0x18] sm:$0xff] %v1000
    %1119 = vst [vmem:[#allocation10 + $0x20] sm:$0xff] %v1005
    %1120 = vst [vmem:[#allocation10 + $0x28] sm:$0xff] %v1008
    %1121 = vst [vmem:[#allocation10 + $0x30] sm:$0xff] %v1013
    %1122 = vst [vmem:[#allocation10 + $0x38] sm:$0xff] %v1016
    %1123 = vst [vmem:[#allocation10 + $0x40] sm:$0xff] %v1021
    %1124 = vst [vmem:[#allocation10 + $0x48] sm:$0xff] %v1024
    %1125 = vst [vmem:[#allocation10 + $0x50] sm:$0xff] %v1029
    %1126 = vst [vmem:[#allocation10 + $0x58] sm:$0xff] %v1032
    %1127 = vst [vmem:[#allocation10 + $0x60] sm:$0xff] %v1037
    %1128 = vst [vmem:[#allocation10 + $0x68] sm:$0xff] %v1040
    %1129 = vst [vmem:[#allocation10 + $0x70] sm:$0xff] %v1045
    %1130 = vst [vmem:[#allocation10 + $0x78] sm:$0xff] %v1048
    %1131 = vst [vmem:[#allocation10 + $0x80] sm:$0xff] %v1053
    %1132 = vst [vmem:[#allocation10 + $0x88] sm:$0xff] %v1056
    %1133 = vst [vmem:[#allocation10 + $0x90] sm:$0xff] %v1061
    %1134 = vst [vmem:[#allocation10 + $0x98] sm:$0xff] %v1064
    %1135 = vst [vmem:[#allocation10 + $0xa0] sm:$0xff] %v1069
    %1136 = vst [vmem:[#allocation10 + $0xa8] sm:$0xff] %v1072
    %1137 = vst [vmem:[#allocation10 + $0xb0] sm:$0xff] %v1077
    %1138 = vst [vmem:[#allocation10 + $0xb8] sm:$0xff] %v1080
    %1139 = vst [vmem:[#allocation10 + $0xc0] sm:$0xff] %v1085
    %1140 = vst [vmem:[#allocation10 + $0xc8] sm:$0xff] %v1088
    %1141 = vst [vmem:[#allocation10 + $0xd0] sm:$0xff] %v1093
    %1142 = vst [vmem:[#allocation10 + $0xd8] sm:$0xff] %v1096
    %1143 = vst [vmem:[#allocation10 + $0xe0] sm:$0xff] %v1101
    %1144 = vst [vmem:[#allocation10 + $0xe8] sm:$0xff] %v1104
    %1145 = vst [vmem:[#allocation10 + $0xf0] sm:$0xff] %v1109
    %1146 = vst [vmem:[#allocation10 + $0xf8] sm:$0xff] %v1112
    // Predicated region
    $region46: #{tpu_custom_call.1} parent=1 // pred_check
      _
    $region47: #{tpu_custom_call.1} parent=1 // pred_check_branch
      %1148 = sbr.rel (0) target = $region49
    $region48: #{tpu_custom_call.1} parent=1 // pred_region
      %s1150 = ssub.s32 4096, 4096
      %1151 = vsyncadd [#allocation4], %s1150
      %s1152 = sshll.u32 [#allocation10], 4
      %s1153 = int_to_ptr.vmem [resolvable:$true] %s1152
      %1158 = dma.vmem_to_hbm [thread:$0]  %s1153, 4096, %s7, [#allocation4], 128, 128, 8
    $region49: #{tpu_custom_call.1} parent=1 // pred_fallthru
      _
    // Predicated region
    $region50: #{tpu_custom_call.1} parent=1 // pred_check
      _
    $region51: #{tpu_custom_call.1} parent=1 // pred_check_branch
      %1160 = sbr.rel (0) target = $region53
    $region52: #{tpu_custom_call.1} parent=1 // pred_region
      %1161 = dma.done [#allocation4], 4096
    $region53: #{tpu_custom_call.1} parent=1 // pred_fallthru
      _
    %1162 = vsyncpa [#allocation3], 1
    %1163 = vsyncpa [#allocation6], 1
    %1164 = vsyncpa [#allocation9], 1
    %1165 = vsyncpa [#allocation4], 1

// kernel: tpu_custom_call.1
$region0: #{tpu_custom_call.1}
  #allocation0 [shape = 'u32[]', space=smem, size = 0x4, offset = 0x4, fixed_abs, tag = 'smem constant byte address 0x4 - core index']
  #allocation1 [shape = 'u32[144,128]{1,0:T(1,128)}', space=vmem, size = 0x12000, scoped, tag = 'internal scratch']
  %s0 = inlined_call_operand.hbm [shape: f32[256,128], index: 0, kind: input, shape index: {}]
  %s1 = inlined_call_operand.hbm [shape: bf16[128,128], index: 1, kind: input, shape index: {}]
  %s2 = inlined_call_operand.vmem [shape: f32[1,128], index: 2, kind: input, shape index: {}]
  %s3 = inlined_call_operand.hbm [shape: bf16[128,128], index: 3, kind: input, shape index: {}]
  %s4 = inlined_call_operand.vmem [shape: f32[1,128], index: 4, kind: input, shape index: {}]
  %s5 = inlined_call_operand.hbm [shape: bf16[128,128], index: 5, kind: input, shape index: {}]
  %s6 = inlined_call_operand.vmem [shape: f32[1,128], index: 6, kind: input, shape index: {}]
  %s7 = inlined_call_operand.hbm [shape: f32[256,128], index: 7, kind: output, shape index: {}]
  %s8 = sld [smem:[#allocation0]]
  $region54: #{tpu_custom_call.1} parent=0
    _
  %s10 = ssub.s32 1, %s8
  %s11 = scalar_select 0, %s10, %s8
  $region1: #{tpu_custom_call.1} parent=0
    #allocation2 [shape = 'u8[131072]{0}', space=vmem, size = 0x20000, scoped, tag = 'input window, operand 0, single buffered']
    #allocation3 [shape = 's32[1]{0}', space=sflag, size = 0x4, scoped, tag = 'scoped memory for tpu_custom_call.1']
    #allocation4 [shape = 's32[1]{0}', space=sflag, size = 0x4, scoped, tag = 'scoped memory for tpu_custom_call.1']
    #allocation5 [shape = 'u8[32768]{0}', space=vmem, size = 0x8000, scoped, tag = 'input window, operand 1, single buffered']
    #allocation6 [shape = 's32[1]{0}', space=sflag, size = 0x4, scoped, tag = 'scoped memory for tpu_custom_call.1']
    #allocation7 [shape = 'u8[32768]{0}', space=vmem, size = 0x8000, scoped, tag = 'input window, operand 3, single buffered']
    #allocation8 [shape = 'u8[32768]{0}', space=vmem, size = 0x8000, scoped, tag = 'input window, operand 5, single buffered']
    #allocation9 [shape = 's32[1]{0}', space=sflag, size = 0x4, scoped, tag = 'scoped memory for tpu_custom_call.1']
    #allocation10 [shape = 'u8[131072]{0}', space=vmem, size = 0x20000, scoped, tag = 'output window, operand 0, single buffered']
    %12 = vsyncpa [#allocation3], 0
    %13 = vsyncpa [#allocation6], 0
    %14 = vsyncpa [#allocation9], 0
    %15 = vsyncpa [#allocation4], 0
    // Predicated region
    $region2: #{tpu_custom_call.1} parent=1 // pred_check
      _
    $region3: #{tpu_custom_call.1} parent=1 // pred_check_branch
      %17 = sbr.rel (0) target = $region5
    $region4: #{tpu_custom_call.1} parent=1 // pred_region
      %s19 = ssub.s32 4096, 4096
      %20 = vsyncadd [#allocation3], %s19
      %s21 = sshll.u32 [#allocation2], 4
      %s22 = int_to_ptr.vmem [resolvable:$true] %s21
      %27 = dma.hbm_to_vmem [thread:$0]  %s0, 4096, %s22, [#allocation3], 128, 128, 8
    $region5: #{tpu_custom_call.1} parent=1 // pred_fallthru
      _
    // Predicated region
    $region6: #{tpu_custom_call.1} parent=1 // pred_check
      _
    $region7: #{tpu_custom_call.1} parent=1 // pred_check_branch
      %29 = sbr.rel (0) target = $region9
    $region8: #{tpu_custom_call.1} parent=1 // pred_region
      %s31 = ssub.s32 1024, 1024
      %32 = vsyncadd [#allocation6], %s31
      %s33 = sshll.u32 [#allocation5], 4
      %s34 = int_to_ptr.vmem [resolvable:$true] %s33
      %39 = dma.hbm_to_vmem [thread:$0]  %s1, 1024, %s34, [#allocation6], 64, 64, 4
    $region9: #{tpu_custom_call.1} parent=1 // pred_fallthru
      _
    // Predicated region
    $region10: #{tpu_custom_call.1} parent=1 // pred_check
      _
    $region11: #{tpu_custom_call.1} parent=1 // pred_check_branch
      %41 = sbr.rel (0) target = $region13
    $region12: #{tpu_custom_call.1} parent=1 // pred_region
      _
    $region13: #{tpu_custom_call.1} parent=1 // pred_fallthru
      _
    // Predicated region
    $region14: #{tpu_custom_call.1} parent=1 // pred_check
      _
    $region15: #{tpu_custom_call.1} parent=1 // pred_check_branch
      %43 = sbr.rel (0) target = $region17
    $region16: #{tpu_custom_call.1} parent=1 // pred_region
      %s45 = ssub.s32 1024, 1024
      %46 = vsyncadd [#allocation6], %s45
      %s47 = sshll.u32 [#allocation7], 4
      %s48 = int_to_ptr.vmem [resolvable:$true] %s47
      %53 = dma.hbm_to_vmem [thread:$0]  %s3, 1024, %s48, [#allocation6], 64, 64, 4
    $region17: #{tpu_custom_call.1} parent=1 // pred_fallthru
      _
    // Predicated region
    $region18: #{tpu_custom_call.1} parent=1 // pred_check
      _
    $region19: #{tpu_custom_call.1} parent=1 // pred_check_branch
      %55 = sbr.rel (0) target = $region21
    $region20: #{tpu_custom_call.1} parent=1 // pred_region
      _
    $region21: #{tpu_custom_call.1} parent=1 // pred_fallthru
      _
    // Predicated region
    $region22: #{tpu_custom_call.1} parent=1 // pred_check
      _
    $region23: #{tpu_custom_call.1} parent=1 // pred_check_branch
      %57 = sbr.rel (0) target = $region25
    $region24: #{tpu_custom_call.1} parent=1 // pred_region
      %s59 = ssub.s32 1024, 1024
      %60 = vsyncadd [#allocation9], %s59
      %s61 = sshll.u32 [#allocation8], 4
      %s62 = int_to_ptr.vmem [resolvable:$true] %s61
      %67 = dma.hbm_to_vmem [thread:$0]  %s5, 1024, %s62, [#allocation9], 64, 64, 4
    $region25: #{tpu_custom_call.1} parent=1 // pred_fallthru
      _
    // Predicated region
    $region26: #{tpu_custom_call.1} parent=1 // pred_check
      _
    $region27: #{tpu_custom_call.1} parent=1 // pred_check_branch
      %69 = sbr.rel (0) target = $region29
    $region28: #{tpu_custom_call.1} parent=1 // pred_region
      _
    $region29: #{tpu_custom_call.1} parent=1 // pred_fallthru
      _
    // Predicated region
    $region30: #{tpu_custom_call.1} parent=1 // pred_check
      _
    $region31: #{tpu_custom_call.1} parent=1 // pred_check_branch
      %71 = sbr.rel (0) target = $region33
    $region32: #{tpu_custom_call.1} parent=1 // pred_region
      %72 = dma.done [#allocation3], 4096
    $region33: #{tpu_custom_call.1} parent=1 // pred_fallthru
      _
    // Predicated region
    $region34: #{tpu_custom_call.1} parent=1 // pred_check
      _
    $region35: #{tpu_custom_call.1} parent=1 // pred_check_branch
      %74 = sbr.rel (0) target = $region37
    $region36: #{tpu_custom_call.1} parent=1 // pred_region
      %75 = dma.done [#allocation6], 1024
    $region37: #{tpu_custom_call.1} parent=1 // pred_fallthru
      _
    // Predicated region
    $region38: #{tpu_custom_call.1} parent=1 // pred_check
      _
    $region39: #{tpu_custom_call.1} parent=1 // pred_check_branch
      %77 = sbr.rel (0) target = $region41
    $region40: #{tpu_custom_call.1} parent=1 // pred_region
      %78 = dma.done [#allocation6], 1024
    $region41: #{tpu_custom_call.1} parent=1 // pred_fallthru
      _
    // Predicated region
    $region42: #{tpu_custom_call.1} parent=1 // pred_check
      _
    $region43: #{tpu_custom_call.1} parent=1 // pred_check_branch
      %80 = sbr.rel (0) target = $region45
    $region44: #{tpu_custom_call.1} parent=1 // pred_region
      %81 = dma.done [#allocation9], 1024
    $region45: #{tpu_custom_call.1} parent=1 // pred_fallthru
      _
    %v83 = vld [vmem:[#allocation2] sm:$0xff]
    %v84 = vld [vmem:[#allocation2 + $0x8] sm:$0xff]
    %v85 = vld [vmem:[#allocation2 + $0x10] sm:$0xff]
    %v86 = vld [vmem:[#allocation2 + $0x18] sm:$0xff]
    %v87 = vld [vmem:[#allocation2 + $0x20] sm:$0xff]
    %v88 = vld [vmem:[#allocation2 + $0x28] sm:$0xff]
    %v89 = vld [vmem:[#allocation2 + $0x30] sm:$0xff]
    %v90 = vld [vmem:[#allocation2 + $0x38] sm:$0xff]
    %v91 = vld [vmem:[#allocation2 + $0x40] sm:$0xff]
    %v92 = vld [vmem:[#allocation2 + $0x48] sm:$0xff]
    %v93 = vld [vmem:[#allocation2 + $0x50] sm:$0xff]
    %v94 = vld [vmem:[#allocation2 + $0x58] sm:$0xff]
    %v95 = vld [vmem:[#allocation2 + $0x60] sm:$0xff]
    %v96 = vld [vmem:[#allocation2 + $0x68] sm:$0xff]
    %v97 = vld [vmem:[#allocation2 + $0x70] sm:$0xff]
    %v98 = vld [vmem:[#allocation2 + $0x78] sm:$0xff]
    %v99 = vld [vmem:[#allocation2 + $0x80] sm:$0xff]
    %v100 = vld [vmem:[#allocation2 + $0x88] sm:$0xff]
    %v101 = vld [vmem:[#allocation2 + $0x90] sm:$0xff]
    %v102 = vld [vmem:[#allocation2 + $0x98] sm:$0xff]
    %v103 = vld [vmem:[#allocation2 + $0xa0] sm:$0xff]
    %v104 = vld [vmem:[#allocation2 + $0xa8] sm:$0xff]
    %v105 = vld [vmem:[#allocation2 + $0xb0] sm:$0xff]
    %v106 = vld [vmem:[#allocation2 + $0xb8] sm:$0xff]
    %v107 = vld [vmem:[#allocation2 + $0xc0] sm:$0xff]
    %v108 = vld [vmem:[#allocation2 + $0xc8] sm:$0xff]
    %v109 = vld [vmem:[#allocation2 + $0xd0] sm:$0xff]
    %v110 = vld [vmem:[#allocation2 + $0xd8] sm:$0xff]
    %v111 = vld [vmem:[#allocation2 + $0xe0] sm:$0xff]
    %v112 = vld [vmem:[#allocation2 + $0xe8] sm:$0xff]
    %v113 = vld [vmem:[#allocation2 + $0xf0] sm:$0xff]
    %v114 = vld [vmem:[#allocation2 + $0xf8] sm:$0xff]
    %v115 = vpack.c.bf16 %v84, %v83
    %v116 = vpack.c.bf16 %v86, %v85
    %v117 = vpack.c.bf16 %v88, %v87
    %v118 = vpack.c.bf16 %v90, %v89
    %v119 = vpack.c.bf16 %v92, %v91
    %v120 = vpack.c.bf16 %v94, %v93
    %v121 = vpack.c.bf16 %v96, %v95
    %v122 = vpack.c.bf16 %v98, %v97
    %v123 = vpack.c.bf16 %v100, %v99
    %v124 = vpack.c.bf16 %v102, %v101
    %v125 = vpack.c.bf16 %v104, %v103
    %v126 = vpack.c.bf16 %v106, %v105
    %v127 = vpack.c.bf16 %v108, %v107
    %v128 = vpack.c.bf16 %v110, %v109
    %v129 = vpack.c.bf16 %v112, %v111
    %v130 = vpack.c.bf16 %v114, %v113
    %v131 = vld [vmem:[#allocation5] sm:$0xf]
    %v132 = vld [vmem:[#allocation5 + $0x4] sm:$0xf]
    %v133 = vld [vmem:[#allocation5 + $0x8] sm:$0xf]
    %v134 = vld [vmem:[#allocation5 + $0xc] sm:$0xf]
    %v135 = vld [vmem:[#allocation5 + $0x10] sm:$0xf]
    %v136 = vld [vmem:[#allocation5 + $0x14] sm:$0xf]
    %v137 = vld [vmem:[#allocation5 + $0x18] sm:$0xf]
    %v138 = vld [vmem:[#allocation5 + $0x1c] sm:$0xf]
    %v139 = vld [vmem:[#allocation5 + $0x20] sm:$0xf]
    %v140 = vld [vmem:[#allocation5 + $0x24] sm:$0xf]
    %v141 = vld [vmem:[#allocation5 + $0x28] sm:$0xf]
    %v142 = vld [vmem:[#allocation5 + $0x2c] sm:$0xf]
    %v143 = vld [vmem:[#allocation5 + $0x30] sm:$0xf]
    %v144 = vld [vmem:[#allocation5 + $0x34] sm:$0xf]
    %v145 = vld [vmem:[#allocation5 + $0x38] sm:$0xf]
    %v146 = vld [vmem:[#allocation5 + $0x3c] sm:$0xf]
    %v147 = vld [vmem:[%s2] sm:$0x1]
    %v149 = vlaneseq
    %v150 = vshrl.u32 %v149, 7
    %v151 = vsub.s32 0, %v150
    %v152 = vrot.slane %v147, %v151
    %v170 = vunpack.c.l.b16 %v131
    %v171 = vunpack.c.l.b16 %v132
    %v172 = vunpack.c.l.b16 %v133
    %v173 = vunpack.c.l.b16 %v134
    %v174 = vunpack.c.l.b16 %v135
    %v175 = vunpack.c.l.b16 %v136
    %v176 = vunpack.c.l.b16 %v137
    %v177 = vunpack.c.l.b16 %v138
    %v178 = vunpack.c.l.b16 %v139
    %v179 = vunpack.c.l.b16 %v140
    %v180 = vunpack.c.l.b16 %v141
    %v181 = vunpack.c.l.b16 %v142
    %v182 = vunpack.c.l.b16 %v143
    %v183 = vunpack.c.l.b16 %v144
    %v184 = vunpack.c.l.b16 %v145
    %v185 = vunpack.c.l.b16 %v146
    %v186 = vpack.c.b16 %v171, %v170
    %v187 = vpack.c.b16 %v173, %v172
    %v188 = vpack.c.b16 %v175, %v174
    %v189 = vpack.c.b16 %v177, %v176
    %v190 = vpack.c.b16 %v179, %v178
    %v191 = vpack.c.b16 %v181, %v180
    %v192 = vpack.c.b16 %v183, %v182
    %v193 = vpack.c.b16 %v185, %v184
    %202 = vmatprep.subr.bf16.mxu0 0
    %203 = vmatpush1.bf16.msra.mxu0 %v186
    %204 = vmatprep.subr.bf16.mxu0 0
    %205 = vmatpush1.bf16.msra.mxu0 %v187
    %206 = vmatprep.subr.bf16.mxu0 0
    %207 = vmatpush1.bf16.msra.mxu0 %v188
    %208 = vmatprep.subr.bf16.mxu0 0
    %209 = vmatpush1.bf16.msra.mxu0 %v189
    %210 = vmatprep.subr.bf16.mxu0 0
    %211 = vmatpush1.bf16.msra.mxu0 %v190
    %212 = vmatprep.subr.bf16.mxu0 0
    %213 = vmatpush1.bf16.msra.mxu0 %v191
    %214 = vmatprep.subr.bf16.mxu0 0
    %215 = vmatpush1.bf16.msra.mxu0 %v192
    %216 = vmatprep.subr.bf16.mxu0 0
    %217 = vmatpush1.bf16.msra.mxu0 %v193
    %218 = vmatprep.subr.bf16.mxu0 0
    %219 = vmatpush1.bf16.msra.mxu0 0
    %220 = vmatprep.subr.bf16.mxu0 0
    %221 = vmatpush1.bf16.msra.mxu0 0
    %222 = vmatprep.subr.bf16.mxu0 0
    %223 = vmatpush1.bf16.msra.mxu0 0
    %224 = vmatprep.subr.bf16.mxu0 0
    %225 = vmatpush1.bf16.msra.mxu0 0
    %226 = vmatprep.subr.bf16.mxu0 0
    %227 = vmatpush1.bf16.msra.mxu0 0
    %228 = vmatprep.subr.bf16.mxu0 0
    %229 = vmatpush1.bf16.msra.mxu0 0
    %230 = vmatprep.subr.bf16.mxu0 0
    %231 = vmatpush1.bf16.msra.mxu0 0
    %232 = vmatprep.subr.bf16.mxu0 0
    %233 = vmatpush1.bf16.msra.mxu0 0
    %234 = vmatprep.mubr.bf16.mxu0 0
    %235 = vmatmul.mubr.bf16.gmra.mrb[0].mxu0 %v115
    %v236 = vpop.f32.mrb[0].mxu0
    %v237 = vadd.f32 %v152, %v236
    %v238 = vpop.f32.mrb[0].mxu0
    %v239 = vpop.f32.mrb[0].mxu0
    %v240 = vadd.f32 %v152, %v239
    %v241 = vpop.f32.mrb[0].mxu0
    %242 = vmatprep.mubr.bf16.mxu0 0
    %243 = vmatmul.mubr.bf16.gmra.mrb[0].mxu0 %v116
    %v244 = vpop.f32.mrb[0].mxu0
    %v245 = vadd.f32 %v152, %v244
    %v246 = vpop.f32.mrb[0].mxu0
    %v247 = vpop.f32.mrb[0].mxu0
    %v248 = vadd.f32 %v152, %v247
    %v249 = vpop.f32.mrb[0].mxu0
    %250 = vmatprep.mubr.bf16.mxu0 0
    %251 = vmatmul.mubr.bf16.gmra.mrb[0].mxu0 %v117
    %v252 = vpop.f32.mrb[0].mxu0
    %v253 = vadd.f32 %v152, %v252
    %v254 = vpop.f32.mrb[0].mxu0
    %v255 = vpop.f32.mrb[0].mxu0
    %v256 = vadd.f32 %v152, %v255
    %v257 = vpop.f32.mrb[0].mxu0
    %258 = vmatprep.mubr.bf16.mxu0 0
    %259 = vmatmul.mubr.bf16.gmra.mrb[0].mxu0 %v118
    %v260 = vpop.f32.mrb[0].mxu0
    %v261 = vadd.f32 %v152, %v260
    %v262 = vpop.f32.mrb[0].mxu0
    %v263 = vpop.f32.mrb[0].mxu0
    %v264 = vadd.f32 %v152, %v263
    %v265 = vpop.f32.mrb[0].mxu0
    %266 = vmatprep.mubr.bf16.mxu0 0
    %267 = vmatmul.mubr.bf16.gmra.mrb[0].mxu0 %v119
    %v268 = vpop.f32.mrb[0].mxu0
    %v269 = vadd.f32 %v152, %v268
    %v270 = vpop.f32.mrb[0].mxu0
    %v271 = vpop.f32.mrb[0].mxu0
    %v272 = vadd.f32 %v152, %v271
    %v273 = vpop.f32.mrb[0].mxu0
    %274 = vmatprep.mubr.bf16.mxu0 0
    %275 = vmatmul.mubr.bf16.gmra.mrb[0].mxu0 %v120
    %v276 = vpop.f32.mrb[0].mxu0
    %v277 = vadd.f32 %v152, %v276
    %v278 = vpop.f32.mrb[0].mxu0
    %v279 = vpop.f32.mrb[0].mxu0
    %v280 = vadd.f32 %v152, %v279
    %v281 = vpop.f32.mrb[0].mxu0
    %282 = vmatprep.mubr.bf16.mxu0 0
    %283 = vmatmul.mubr.bf16.gmra.mrb[0].mxu0 %v121
    %v284 = vpop.f32.mrb[0].mxu0
    %v285 = vadd.f32 %v152, %v284
    %v286 = vpop.f32.mrb[0].mxu0
    %v287 = vpop.f32.mrb[0].mxu0
    %v288 = vadd.f32 %v152, %v287
    %v289 = vpop.f32.mrb[0].mxu0
    %290 = vmatprep.mubr.bf16.mxu0 0
    %291 = vmatmul.mubr.bf16.gmra.mrb[0].mxu0 %v122
    %v292 = vpop.f32.mrb[0].mxu0
    %v293 = vadd.f32 %v152, %v292
    %v294 = vpop.f32.mrb[0].mxu0
    %v295 = vpop.f32.mrb[0].mxu0
    %v296 = vadd.f32 %v152, %v295
    %v297 = vpop.f32.mrb[0].mxu0
    %298 = vmatprep.mubr.bf16.mxu0 0
    %299 = vmatmul.mubr.bf16.gmra.mrb[0].mxu0 %v123
    %v300 = vpop.f32.mrb[0].mxu0
    %v301 = vadd.f32 %v152, %v300
    %v302 = vpop.f32.mrb[0].mxu0
    %v303 = vpop.f32.mrb[0].mxu0
    %v304 = vadd.f32 %v152, %v303
    %v305 = vpop.f32.mrb[0].mxu0
    %306 = vmatprep.mubr.bf16.mxu0 0
    %307 = vmatmul.mubr.bf16.gmra.mrb[0].mxu0 %v124
    %v308 = vpop.f32.mrb[0].mxu0
    %v309 = vadd.f32 %v152, %v308
    %v310 = vpop.f32.mrb[0].mxu0
    %v311 = vpop.f32.mrb[0].mxu0
    %v312 = vadd.f32 %v152, %v311
    %v313 = vpop.f32.mrb[0].mxu0
    %314 = vmatprep.mubr.bf16.mxu0 0
    %315 = vmatmul.mubr.bf16.gmra.mrb[0].mxu0 %v125
    %v316 = vpop.f32.mrb[0].mxu0
    %v317 = vadd.f32 %v152, %v316
    %v318 = vpop.f32.mrb[0].mxu0
    %v319 = vpop.f32.mrb[0].mxu0
    %v320 = vadd.f32 %v152, %v319
    %v321 = vpop.f32.mrb[0].mxu0
    %322 = vmatprep.mubr.bf16.mxu0 0
    %323 = vmatmul.mubr.bf16.gmra.mrb[0].mxu0 %v126
    %v324 = vpop.f32.mrb[0].mxu0
    %v325 = vadd.f32 %v152, %v324
    %v326 = vpop.f32.mrb[0].mxu0
    %v327 = vpop.f32.mrb[0].mxu0
    %v328 = vadd.f32 %v152, %v327
    %v329 = vpop.f32.mrb[0].mxu0
    %330 = vmatprep.mubr.bf16.mxu0 0
    %331 = vmatmul.mubr.bf16.gmra.mrb[0].mxu0 %v127
    %v332 = vpop.f32.mrb[0].mxu0
    %v333 = vadd.f32 %v152, %v332
    %v334 = vpop.f32.mrb[0].mxu0
    %v335 = vpop.f32.mrb[0].mxu0
    %v336 = vadd.f32 %v152, %v335
    %v337 = vpop.f32.mrb[0].mxu0
    %338 = vmatprep.mubr.bf16.mxu0 0
    %339 = vmatmul.mubr.bf16.gmra.mrb[0].mxu0 %v128
    %v340 = vpop.f32.mrb[0].mxu0
    %v341 = vadd.f32 %v152, %v340
    %v342 = vpop.f32.mrb[0].mxu0
    %v343 = vpop.f32.mrb[0].mxu0
    %v344 = vadd.f32 %v152, %v343
    %v345 = vpop.f32.mrb[0].mxu0
    %346 = vmatprep.mubr.bf16.mxu0 0
    %347 = vmatmul.mubr.bf16.gmra.mrb[0].mxu0 %v129
    %v348 = vpop.f32.mrb[0].mxu0
    %v349 = vadd.f32 %v152, %v348
    %v350 = vpop.f32.mrb[0].mxu0
    %v351 = vpop.f32.mrb[0].mxu0
    %v352 = vadd.f32 %v152, %v351
    %v353 = vpop.f32.mrb[0].mxu0
    %354 = vmatprep.mubr.bf16.mxu0 0
    %355 = vmatmul.mubr.bf16.gmra.mrb[0].mxu0 %v130
    %v356 = vpop.f32.mrb[0].mxu0
    %v357 = vadd.f32 %v152, %v356
    %v358 = vpop.f32.mrb[0].mxu0
    %v359 = vpop.f32.mrb[0].mxu0
    %v360 = vadd.f32 %v152, %v359
    %v361 = vpop.f32.mrb[0].mxu0
    %362 = vdwg.mxu0
    %v363 = vmul.f32 %v237, 0.5
    %v364 = vmul.f32 %v240, 0.5
    %v365 = vmul.f32 %v245, 0.5
    %v366 = vmul.f32 %v248, 0.5
    %v367 = vmul.f32 %v253, 0.5
    %v368 = vmul.f32 %v256, 0.5
    %v369 = vmul.f32 %v261, 0.5
    %v370 = vmul.f32 %v264, 0.5
    %v371 = vmul.f32 %v269, 0.5
    %v372 = vmul.f32 %v272, 0.5
    %v373 = vmul.f32 %v277, 0.5
    %v374 = vmul.f32 %v280, 0.5
    %v375 = vmul.f32 %v285, 0.5
    %v376 = vmul.f32 %v288, 0.5
    %v377 = vmul.f32 %v293, 0.5
    %v378 = vmul.f32 %v296, 0.5
    %v379 = vmul.f32 %v301, 0.5
    %v380 = vmul.f32 %v304, 0.5
    %v381 = vmul.f32 %v309, 0.5
    %v382 = vmul.f32 %v312, 0.5
    %v383 = vmul.f32 %v317, 0.5
    %v384 = vmul.f32 %v320, 0.5
    %v385 = vmul.f32 %v325, 0.5
    %v386 = vmul.f32 %v328, 0.5
    %v387 = vmul.f32 %v333, 0.5
    %v388 = vmul.f32 %v336, 0.5
    %v389 = vmul.f32 %v341, 0.5
    %v390 = vmul.f32 %v344, 0.5
    %v391 = vmul.f32 %v349, 0.5
    %v392 = vmul.f32 %v352, 0.5
    %v393 = vmul.f32 %v357, 0.5
    %v394 = vmul.f32 %v360, 0.5
    %v395 = vtanh.pop %v363
    %v396 = vtanh.pop %v364
    %v397 = vtanh.pop %v365
    %v398 = vtanh.pop %v366
    %v399 = vtanh.pop %v367
    %v400 = vtanh.pop %v368
    %v401 = vtanh.pop %v369
    %v402 = vtanh.pop %v370
    %v403 = vtanh.pop %v371
    %v404 = vtanh.pop %v372
    %v405 = vtanh.pop %v373
    %v406 = vtanh.pop %v374
    %v407 = vtanh.pop %v375
    %v408 = vtanh.pop %v376
    %v409 = vtanh.pop %v377
    %v410 = vtanh.pop %v378
    %v411 = vtanh.pop %v379
    %v412 = vtanh.pop %v380
    %v413 = vtanh.pop %v381
    %v414 = vtanh.pop %v382
    %v415 = vtanh.pop %v383
    %v416 = vtanh.pop %v384
    %v417 = vtanh.pop %v385
    %v418 = vtanh.pop %v386
    %v419 = vtanh.pop %v387
    %v420 = vtanh.pop %v388
    %v421 = vtanh.pop %v389
    %v422 = vtanh.pop %v390
    %v423 = vtanh.pop %v391
    %v424 = vtanh.pop %v392
    %v425 = vtanh.pop %v393
    %v426 = vtanh.pop %v394
    %v427 = vadd.f32 %v395, 1.0
    %v428 = vadd.f32 %v396, 1.0
    %v429 = vadd.f32 %v397, 1.0
    %v430 = vadd.f32 %v398, 1.0
    %v431 = vadd.f32 %v399, 1.0
    %v432 = vadd.f32 %v400, 1.0
    %v433 = vadd.f32 %v401, 1.0
    %v434 = vadd.f32 %v402, 1.0
    %v435 = vadd.f32 %v403, 1.0
    %v436 = vadd.f32 %v404, 1.0
    %v437 = vadd.f32 %v405, 1.0
    %v438 = vadd.f32 %v406, 1.0
    %v439 = vadd.f32 %v407, 1.0
    %v440 = vadd.f32 %v408, 1.0
    %v441 = vadd.f32 %v409, 1.0
    %v442 = vadd.f32 %v410, 1.0
    %v443 = vadd.f32 %v411, 1.0
    %v444 = vadd.f32 %v412, 1.0
    %v445 = vadd.f32 %v413, 1.0
    %v446 = vadd.f32 %v414, 1.0
    %v447 = vadd.f32 %v415, 1.0
    %v448 = vadd.f32 %v416, 1.0
    %v449 = vadd.f32 %v417, 1.0
    %v450 = vadd.f32 %v418, 1.0
    %v451 = vadd.f32 %v419, 1.0
    %v452 = vadd.f32 %v420, 1.0
    %v453 = vadd.f32 %v421, 1.0
    %v454 = vadd.f32 %v422, 1.0
    %v455 = vadd.f32 %v423, 1.0
    %v456 = vadd.f32 %v424, 1.0
    %v457 = vadd.f32 %v425, 1.0
    %v458 = vadd.f32 %v426, 1.0
    %v459 = vmul.f32 %v363, %v427
    %v460 = vmul.f32 %v364, %v428
    %v461 = vmul.f32 %v365, %v429
    %v462 = vmul.f32 %v366, %v430
    %v463 = vmul.f32 %v367, %v431
    %v464 = vmul.f32 %v368, %v432
    %v465 = vmul.f32 %v369, %v433
    %v466 = vmul.f32 %v370, %v434
    %v467 = vmul.f32 %v371, %v435
    %v468 = vmul.f32 %v372, %v436
    %v469 = vmul.f32 %v373, %v437
    %v470 = vmul.f32 %v374, %v438
    %v471 = vmul.f32 %v375, %v439
    %v472 = vmul.f32 %v376, %v440
    %v473 = vmul.f32 %v377, %v441
    %v474 = vmul.f32 %v378, %v442
    %v475 = vmul.f32 %v379, %v443
    %v476 = vmul.f32 %v380, %v444
    %v477 = vmul.f32 %v381, %v445
    %v478 = vmul.f32 %v382, %v446
    %v479 = vmul.f32 %v383, %v447
    %v480 = vmul.f32 %v384, %v448
    %v481 = vmul.f32 %v385, %v449
    %v482 = vmul.f32 %v386, %v450
    %v483 = vmul.f32 %v387, %v451
    %v484 = vmul.f32 %v388, %v452
    %v485 = vmul.f32 %v389, %v453
    %v486 = vmul.f32 %v390, %v454
    %v487 = vmul.f32 %v391, %v455
    %v488 = vmul.f32 %v392, %v456
    %v489 = vmul.f32 %v393, %v457
    %v490 = vmul.f32 %v394, %v458
    %v491 = vpack.c.bf16 %v460, %v459
    %v492 = vpack.c.bf16 %v462, %v461
    %v493 = vpack.c.bf16 %v464, %v463
    %v494 = vpack.c.bf16 %v466, %v465
    %v495 = vpack.c.bf16 %v468, %v467
    %v496 = vpack.c.bf16 %v470, %v469
    %v497 = vpack.c.bf16 %v472, %v471
    %v498 = vpack.c.bf16 %v474, %v473
    %v499 = vpack.c.bf16 %v476, %v475
    %v500 = vpack.c.bf16 %v478, %v477
    %v501 = vpack.c.bf16 %v480, %v479
    %v502 = vpack.c.bf16 %v482, %v481
    %v503 = vpack.c.bf16 %v484, %v483
    %v504 = vpack.c.bf16 %v486, %v485
    %v505 = vpack.c.bf16 %v488, %v487
    %v506 = vpack.c.bf16 %v490, %v489
    %v507 = vld [vmem:[#allocation7] sm:$0xf]
    %v508 = vld [vmem:[#allocation7 + $0x4] sm:$0xf]
    %v509 = vld [vmem:[#allocation7 + $0x8] sm:$0xf]
    %v510 = vld [vmem:[#allocation7 + $0xc] sm:$0xf]
    %v511 = vld [vmem:[#allocation7 + $0x10] sm:$0xf]
    %v512 = vld [vmem:[#allocation7 + $0x14] sm:$0xf]
    %v513 = vld [vmem:[#allocation7 + $0x18] sm:$0xf]
    %v514 = vld [vmem:[#allocation7 + $0x1c] sm:$0xf]
    %v515 = vld [vmem:[#allocation7 + $0x20] sm:$0xf]
    %v516 = vld [vmem:[#allocation7 + $0x24] sm:$0xf]
    %v517 = vld [vmem:[#allocation7 + $0x28] sm:$0xf]
    %v518 = vld [vmem:[#allocation7 + $0x2c] sm:$0xf]
    %v519 = vld [vmem:[#allocation7 + $0x30] sm:$0xf]
    %v520 = vld [vmem:[#allocation7 + $0x34] sm:$0xf]
    %v521 = vld [vmem:[#allocation7 + $0x38] sm:$0xf]
    %v522 = vld [vmem:[#allocation7 + $0x3c] sm:$0xf]
    %v523 = vld [vmem:[%s4] sm:$0x1]
    %v525 = vlaneseq
    %v526 = vshrl.u32 %v525, 7
    %v527 = vsub.s32 0, %v526
    %v528 = vrot.slane %v523, %v527
    %v546 = vunpack.c.l.b16 %v507
    %v547 = vunpack.c.l.b16 %v508
    %v548 = vunpack.c.l.b16 %v509
    %v549 = vunpack.c.l.b16 %v510
    %v550 = vunpack.c.l.b16 %v511
    %v551 = vunpack.c.l.b16 %v512
    %v552 = vunpack.c.l.b16 %v513
    %v553 = vunpack.c.l.b16 %v514
    %v554 = vunpack.c.l.b16 %v515
    %v555 = vunpack.c.l.b16 %v516
    %v556 = vunpack.c.l.b16 %v517
    %v557 = vunpack.c.l.b16 %v518
    %v558 = vunpack.c.l.b16 %v519
    %v559 = vunpack.c.l.b16 %v520
    %v560 = vunpack.c.l.b16 %v521
    %v561 = vunpack.c.l.b16 %v522
    %v562 = vpack.c.b16 %v547, %v546
    %v563 = vpack.c.b16 %v549, %v548
    %v564 = vpack.c.b16 %v551, %v550
    %v565 = vpack.c.b16 %v553, %v552
    %v566 = vpack.c.b16 %v555, %v554
    %v567 = vpack.c.b16 %v557, %v556
    %v568 = vpack.c.b16 %v559, %v558
    %v569 = vpack.c.b16 %v561, %v560
    %578 = vmatprep.subr.bf16.mxu0 0
    %579 = vmatpush1.bf16.msra.mxu0 %v562
    %580 = vmatprep.subr.bf16.mxu0 0
    %581 = vmatpush1.bf16.msra.mxu0 %v563
    %582 = vmatprep.subr.bf16.mxu0 0
    %583 = vmatpush1.bf16.msra.mxu0 %v564
    %584 = vmatprep.subr.bf16.mxu0 0
    %585 = vmatpush1.bf16.msra.mxu0 %v565
    %586 = vmatprep.subr.bf16.mxu0 0
    %587 = vmatpush1.bf16.msra.mxu0 %v566
    %588 = vmatprep.subr.bf16.mxu0 0
    %589 = vmatpush1.bf16.msra.mxu0 %v567
    %590 = vmatprep.subr.bf16.mxu0 0
    %591 = vmatpush1.bf16.msra.mxu0 %v568
    %592 = vmatprep.subr.bf16.mxu0 0
    %593 = vmatpush1.bf16.msra.mxu0 %v569
    %594 = vmatprep.subr.bf16.mxu0 0
    %595 = vmatpush1.bf16.msra.mxu0 0
    %596 = vmatprep.subr.bf16.mxu0 0
    %597 = vmatpush1.bf16.msra.mxu0 0
    %598 = vmatprep.subr.bf16.mxu0 0
    %599 = vmatpush1.bf16.msra.mxu0 0
    %600 = vmatprep.subr.bf16.mxu0 0
    %601 = vmatpush1.bf16.msra.mxu0 0
    %602 = vmatprep.subr.bf16.mxu0 0
    %603 = vmatpush1.bf16.msra.mxu0 0
    %604 = vmatprep.subr.bf16.mxu0 0
    %605 = vmatpush1.bf16.msra.mxu0 0
    %606 = vmatprep.subr.bf16.mxu0 0
    %607 = vmatpush1.bf16.msra.mxu0 0
    %608 = vmatprep.subr.bf16.mxu0 0
    %609 = vmatpush1.bf16.msra.mxu0 0
    %610 = vmatprep.mubr.bf16.mxu0 0
    %611 = vmatmul.mubr.bf16.gmra.mrb[0].mxu0 %v491
    %v612 = vpop.f32.mrb[0].mxu0
    %v613 = vadd.f32 %v528, %v612
    %v614 = vpop.f32.mrb[0].mxu0
    %v615 = vpop.f32.mrb[0].mxu0
    %v616 = vadd.f32 %v528, %v615
    %v617 = vpop.f32.mrb[0].mxu0
    %618 = vmatprep.mubr.bf16.mxu0 0
    %619 = vmatmul.mubr.bf16.gmra.mrb[0].mxu0 %v492
    %v620 = vpop.f32.mrb[0].mxu0
    %v621 = vadd.f32 %v528, %v620
    %v622 = vpop.f32.mrb[0].mxu0
    %v623 = vpop.f32.mrb[0].mxu0
    %v624 = vadd.f32 %v528, %v623
    %v625 = vpop.f32.mrb[0].mxu0
    %626 = vmatprep.mubr.bf16.mxu0 0
    %627 = vmatmul.mubr.bf16.gmra.mrb[0].mxu0 %v493
    %v628 = vpop.f32.mrb[0].mxu0
    %v629 = vadd.f32 %v528, %v628
    %v630 = vpop.f32.mrb[0].mxu0
    %v631 = vpop.f32.mrb[0].mxu0
    %v632 = vadd.f32 %v528, %v631
    %v633 = vpop.f32.mrb[0].mxu0
    %634 = vmatprep.mubr.bf16.mxu0 0
    %635 = vmatmul.mubr.bf16.gmra.mrb[0].mxu0 %v494
    %v636 = vpop.f32.mrb[0].mxu0
    %v637 = vadd.f32 %v528, %v636
    %v638 = vpop.f32.mrb[0].mxu0
    %v639 = vpop.f32.mrb[0].mxu0
    %v640 = vadd.f32 %v528, %v639
    %v641 = vpop.f32.mrb[0].mxu0
    %642 = vmatprep.mubr.bf16.mxu0 0
    %643 = vmatmul.mubr.bf16.gmra.mrb[0].mxu0 %v495
    %v644 = vpop.f32.mrb[0].mxu0
    %v645 = vadd.f32 %v528, %v644
    %v646 = vpop.f32.mrb[0].mxu0
    %v647 = vpop.f32.mrb[0].mxu0
    %v648 = vadd.f32 %v528, %v647
    %v649 = vpop.f32.mrb[0].mxu0
    %650 = vmatprep.mubr.bf16.mxu0 0
    %651 = vmatmul.mubr.bf16.gmra.mrb[0].mxu0 %v496
    %v652 = vpop.f32.mrb[0].mxu0
    %v653 = vadd.f32 %v528, %v652
    %v654 = vpop.f32.mrb[0].mxu0
    %v655 = vpop.f32.mrb[0].mxu0
    %v656 = vadd.f32 %v528, %v655
    %v657 = vpop.f32.mrb[0].mxu0
    %658 = vmatprep.mubr.bf16.mxu0 0
    %659 = vmatmul.mubr.bf16.gmra.mrb[0].mxu0 %v497
    %v660 = vpop.f32.mrb[0].mxu0
    %v661 = vadd.f32 %v528, %v660
    %v662 = vpop.f32.mrb[0].mxu0
    %v663 = vpop.f32.mrb[0].mxu0
    %v664 = vadd.f32 %v528, %v663
    %v665 = vpop.f32.mrb[0].mxu0
    %666 = vmatprep.mubr.bf16.mxu0 0
    %667 = vmatmul.mubr.bf16.gmra.mrb[0].mxu0 %v498
    %v668 = vpop.f32.mrb[0].mxu0
    %v669 = vadd.f32 %v528, %v668
    %v670 = vpop.f32.mrb[0].mxu0
    %v671 = vpop.f32.mrb[0].mxu0
    %v672 = vadd.f32 %v528, %v671
    %v673 = vpop.f32.mrb[0].mxu0
    %674 = vmatprep.mubr.bf16.mxu0 0
    %675 = vmatmul.mubr.bf16.gmra.mrb[0].mxu0 %v499
    %v676 = vpop.f32.mrb[0].mxu0
    %v677 = vadd.f32 %v528, %v676
    %v678 = vpop.f32.mrb[0].mxu0
    %v679 = vpop.f32.mrb[0].mxu0
    %v680 = vadd.f32 %v528, %v679
    %v681 = vpop.f32.mrb[0].mxu0
    %682 = vmatprep.mubr.bf16.mxu0 0
    %683 = vmatmul.mubr.bf16.gmra.mrb[0].mxu0 %v500
    %v684 = vpop.f32.mrb[0].mxu0
    %v685 = vadd.f32 %v528, %v684
    %v686 = vpop.f32.mrb[0].mxu0
    %v687 = vpop.f32.mrb[0].mxu0
    %v688 = vadd.f32 %v528, %v687
    %v689 = vpop.f32.mrb[0].mxu0
    %690 = vmatprep.mubr.bf16.mxu0 0
    %691 = vmatmul.mubr.bf16.gmra.mrb[0].mxu0 %v501
    %v692 = vpop.f32.mrb[0].mxu0
    %v693 = vadd.f32 %v528, %v692
    %v694 = vpop.f32.mrb[0].mxu0
    %v695 = vpop.f32.mrb[0].mxu0
    %v696 = vadd.f32 %v528, %v695
    %v697 = vpop.f32.mrb[0].mxu0
    %698 = vmatprep.mubr.bf16.mxu0 0
    %699 = vmatmul.mubr.bf16.gmra.mrb[0].mxu0 %v502
    %v700 = vpop.f32.mrb[0].mxu0
    %v701 = vadd.f32 %v528, %v700
    %v702 = vpop.f32.mrb[0].mxu0
    %v703 = vpop.f32.mrb[0].mxu0
    %v704 = vadd.f32 %v528, %v703
    %v705 = vpop.f32.mrb[0].mxu0
    %706 = vmatprep.mubr.bf16.mxu0 0
    %707 = vmatmul.mubr.bf16.gmra.mrb[0].mxu0 %v503
    %v708 = vpop.f32.mrb[0].mxu0
    %v709 = vadd.f32 %v528, %v708
    %v710 = vpop.f32.mrb[0].mxu0
    %v711 = vpop.f32.mrb[0].mxu0
    %v712 = vadd.f32 %v528, %v711
    %v713 = vpop.f32.mrb[0].mxu0
    %714 = vmatprep.mubr.bf16.mxu0 0
    %715 = vmatmul.mubr.bf16.gmra.mrb[0].mxu0 %v504
    %v716 = vpop.f32.mrb[0].mxu0
    %v717 = vadd.f32 %v528, %v716
    %v718 = vpop.f32.mrb[0].mxu0
    %v719 = vpop.f32.mrb[0].mxu0
    %v720 = vadd.f32 %v528, %v719
    %v721 = vpop.f32.mrb[0].mxu0
    %722 = vmatprep.mubr.bf16.mxu0 0
    %723 = vmatmul.mubr.bf16.gmra.mrb[0].mxu0 %v505
    %v724 = vpop.f32.mrb[0].mxu0
    %v725 = vadd.f32 %v528, %v724
    %v726 = vpop.f32.mrb[0].mxu0
    %v727 = vpop.f32.mrb[0].mxu0
    %v728 = vadd.f32 %v528, %v727
    %v729 = vpop.f32.mrb[0].mxu0
    %730 = vmatprep.mubr.bf16.mxu0 0
    %731 = vmatmul.mubr.bf16.gmra.mrb[0].mxu0 %v506
    %v732 = vpop.f32.mrb[0].mxu0
    %v733 = vadd.f32 %v528, %v732
    %v734 = vpop.f32.mrb[0].mxu0
    %v735 = vpop.f32.mrb[0].mxu0
    %v736 = vadd.f32 %v528, %v735
    %v737 = vpop.f32.mrb[0].mxu0
    %738 = vdwg.mxu0
    %v739 = vmul.f32 %v613, 0.5
    %v740 = vmul.f32 %v616, 0.5
    %v741 = vmul.f32 %v621, 0.5
    %v742 = vmul.f32 %v624, 0.5
    %v743 = vmul.f32 %v629, 0.5
    %v744 = vmul.f32 %v632, 0.5
    %v745 = vmul.f32 %v637, 0.5
    %v746 = vmul.f32 %v640, 0.5
    %v747 = vmul.f32 %v645, 0.5
    %v748 = vmul.f32 %v648, 0.5
    %v749 = vmul.f32 %v653, 0.5
    %v750 = vmul.f32 %v656, 0.5
    %v751 = vmul.f32 %v661, 0.5
    %v752 = vmul.f32 %v664, 0.5
    %v753 = vmul.f32 %v669, 0.5
    %v754 = vmul.f32 %v672, 0.5
    %v755 = vmul.f32 %v677, 0.5
    %v756 = vmul.f32 %v680, 0.5
    %v757 = vmul.f32 %v685, 0.5
    %v758 = vmul.f32 %v688, 0.5
    %v759 = vmul.f32 %v693, 0.5
    %v760 = vmul.f32 %v696, 0.5
    %v761 = vmul.f32 %v701, 0.5
    %v762 = vmul.f32 %v704, 0.5
    %v763 = vmul.f32 %v709, 0.5
    %v764 = vmul.f32 %v712, 0.5
    %v765 = vmul.f32 %v717, 0.5
    %v766 = vmul.f32 %v720, 0.5
    %v767 = vmul.f32 %v725, 0.5
    %v768 = vmul.f32 %v728, 0.5
    %v769 = vmul.f32 %v733, 0.5
    %v770 = vmul.f32 %v736, 0.5
    %v771 = vtanh.pop %v739
    %v772 = vtanh.pop %v740
    %v773 = vtanh.pop %v741
    %v774 = vtanh.pop %v742
    %v775 = vtanh.pop %v743
    %v776 = vtanh.pop %v744
    %v777 = vtanh.pop %v745
    %v778 = vtanh.pop %v746
    %v779 = vtanh.pop %v747
    %v780 = vtanh.pop %v748
    %v781 = vtanh.pop %v749
    %v782 = vtanh.pop %v750
    %v783 = vtanh.pop %v751
    %v784 = vtanh.pop %v752
    %v785 = vtanh.pop %v753
    %v786 = vtanh.pop %v754
    %v787 = vtanh.pop %v755
    %v788 = vtanh.pop %v756
    %v789 = vtanh.pop %v757
    %v790 = vtanh.pop %v758
    %v791 = vtanh.pop %v759
    %v792 = vtanh.pop %v760
    %v793 = vtanh.pop %v761
    %v794 = vtanh.pop %v762
    %v795 = vtanh.pop %v763
    %v796 = vtanh.pop %v764
    %v797 = vtanh.pop %v765
    %v798 = vtanh.pop %v766
    %v799 = vtanh.pop %v767
    %v800 = vtanh.pop %v768
    %v801 = vtanh.pop %v769
    %v802 = vtanh.pop %v770
    %v803 = vadd.f32 %v771, 1.0
    %v804 = vadd.f32 %v772, 1.0
    %v805 = vadd.f32 %v773, 1.0
    %v806 = vadd.f32 %v774, 1.0
    %v807 = vadd.f32 %v775, 1.0
    %v808 = vadd.f32 %v776, 1.0
    %v809 = vadd.f32 %v777, 1.0
    %v810 = vadd.f32 %v778, 1.0
    %v811 = vadd.f32 %v779, 1.0
    %v812 = vadd.f32 %v780, 1.0
    %v813 = vadd.f32 %v781, 1.0
    %v814 = vadd.f32 %v782, 1.0
    %v815 = vadd.f32 %v783, 1.0
    %v816 = vadd.f32 %v784, 1.0
    %v817 = vadd.f32 %v785, 1.0
    %v818 = vadd.f32 %v786, 1.0
    %v819 = vadd.f32 %v787, 1.0
    %v820 = vadd.f32 %v788, 1.0
    %v821 = vadd.f32 %v789, 1.0
    %v822 = vadd.f32 %v790, 1.0
    %v823 = vadd.f32 %v791, 1.0
    %v824 = vadd.f32 %v792, 1.0
    %v825 = vadd.f32 %v793, 1.0
    %v826 = vadd.f32 %v794, 1.0
    %v827 = vadd.f32 %v795, 1.0
    %v828 = vadd.f32 %v796, 1.0
    %v829 = vadd.f32 %v797, 1.0
    %v830 = vadd.f32 %v798, 1.0
    %v831 = vadd.f32 %v799, 1.0
    %v832 = vadd.f32 %v800, 1.0
    %v833 = vadd.f32 %v801, 1.0
    %v834 = vadd.f32 %v802, 1.0
    %v835 = vmul.f32 %v739, %v803
    %v836 = vmul.f32 %v740, %v804
    %v837 = vmul.f32 %v741, %v805
    %v838 = vmul.f32 %v742, %v806
    %v839 = vmul.f32 %v743, %v807
    %v840 = vmul.f32 %v744, %v808
    %v841 = vmul.f32 %v745, %v809
    %v842 = vmul.f32 %v746, %v810
    %v843 = vmul.f32 %v747, %v811
    %v844 = vmul.f32 %v748, %v812
    %v845 = vmul.f32 %v749, %v813
    %v846 = vmul.f32 %v750, %v814
    %v847 = vmul.f32 %v751, %v815
    %v848 = vmul.f32 %v752, %v816
    %v849 = vmul.f32 %v753, %v817
    %v850 = vmul.f32 %v754, %v818
    %v851 = vmul.f32 %v755, %v819
    %v852 = vmul.f32 %v756, %v820
    %v853 = vmul.f32 %v757, %v821
    %v854 = vmul.f32 %v758, %v822
    %v855 = vmul.f32 %v759, %v823
    %v856 = vmul.f32 %v760, %v824
    %v857 = vmul.f32 %v761, %v825
    %v858 = vmul.f32 %v762, %v826
    %v859 = vmul.f32 %v763, %v827
    %v860 = vmul.f32 %v764, %v828
    %v861 = vmul.f32 %v765, %v829
    %v862 = vmul.f32 %v766, %v830
    %v863 = vmul.f32 %v767, %v831
    %v864 = vmul.f32 %v768, %v832
    %v865 = vmul.f32 %v769, %v833
    %v866 = vmul.f32 %v770, %v834
    %v867 = vpack.c.bf16 %v836, %v835
    %v868 = vpack.c.bf16 %v838, %v837
    %v869 = vpack.c.bf16 %v840, %v839
    %v870 = vpack.c.bf16 %v842, %v841
    %v871 = vpack.c.bf16 %v844, %v843
    %v872 = vpack.c.bf16 %v846, %v845
    %v873 = vpack.c.bf16 %v848, %v847
    %v874 = vpack.c.bf16 %v850, %v849
    %v875 = vpack.c.bf16 %v852, %v851
    %v876 = vpack.c.bf16 %v854, %v853
    %v877 = vpack.c.bf16 %v856, %v855
    %v878 = vpack.c.bf16 %v858, %v857
    %v879 = vpack.c.bf16 %v860, %v859
    %v880 = vpack.c.bf16 %v862, %v861
    %v881 = vpack.c.bf16 %v864, %v863
    %v882 = vpack.c.bf16 %v866, %v865
    %v883 = vld [vmem:[#allocation8] sm:$0xf]
    %v884 = vld [vmem:[#allocation8 + $0x4] sm:$0xf]
    %v885 = vld [vmem:[#allocation8 + $0x8] sm:$0xf]
    %v886 = vld [vmem:[#allocation8 + $0xc] sm:$0xf]
    %v887 = vld [vmem:[#allocation8 + $0x10] sm:$0xf]
    %v888 = vld [vmem:[#allocation8 + $0x14] sm:$0xf]
    %v889 = vld [vmem:[#allocation8 + $0x18] sm:$0xf]
    %v890 = vld [vmem:[#allocation8 + $0x1c] sm:$0xf]
    %v891 = vld [vmem:[#allocation8 + $0x20] sm:$0xf]
    %v892 = vld [vmem:[#allocation8 + $0x24] sm:$0xf]
    %v893 = vld [vmem:[#allocation8 + $0x28] sm:$0xf]
    %v894 = vld [vmem:[#allocation8 + $0x2c] sm:$0xf]
    %v895 = vld [vmem:[#allocation8 + $0x30] sm:$0xf]
    %v896 = vld [vmem:[#allocation8 + $0x34] sm:$0xf]
    %v897 = vld [vmem:[#allocation8 + $0x38] sm:$0xf]
    %v898 = vld [vmem:[#allocation8 + $0x3c] sm:$0xf]
    %v899 = vld [vmem:[%s6] sm:$0x1]
    %v901 = vlaneseq
    %v902 = vshrl.u32 %v901, 7
    %v903 = vsub.s32 0, %v902
    %v904 = vrot.slane %v899, %v903
    %v922 = vunpack.c.l.b16 %v883
    %v923 = vunpack.c.l.b16 %v884
    %v924 = vunpack.c.l.b16 %v885
    %v925 = vunpack.c.l.b16 %v886
    %v926 = vunpack.c.l.b16 %v887
    %v927 = vunpack.c.l.b16 %v888
    %v928 = vunpack.c.l.b16 %v889
    %v929 = vunpack.c.l.b16 %v890
    %v930 = vunpack.c.l.b16 %v891
    %v931 = vunpack.c.l.b16 %v892
    %v932 = vunpack.c.l.b16 %v893
    %v933 = vunpack.c.l.b16 %v894
    %v934 = vunpack.c.l.b16 %v895
    %v935 = vunpack.c.l.b16 %v896
    %v936 = vunpack.c.l.b16 %v897
    %v937 = vunpack.c.l.b16 %v898
    %v938 = vpack.c.b16 %v923, %v922
    %v939 = vpack.c.b16 %v925, %v924
    %v940 = vpack.c.b16 %v927, %v926
    %v941 = vpack.c.b16 %v929, %v928
    %v942 = vpack.c.b16 %v931, %v930
    %v943 = vpack.c.b16 %v933, %v932
    %v944 = vpack.c.b16 %v935, %v934
    %v945 = vpack.c.b16 %v937, %v936
    %954 = vmatprep.subr.bf16.mxu0 0
    %955 = vmatpush1.bf16.msra.mxu0 %v938
    %956 = vmatprep.subr.bf16.mxu0 0
    %957 = vmatpush1.bf16.msra.mxu0 %v939
    %958 = vmatprep.subr.bf16.mxu0 0
    %959 = vmatpush1.bf16.msra.mxu0 %v940
    %960 = vmatprep.subr.bf16.mxu0 0
    %961 = vmatpush1.bf16.msra.mxu0 %v941
    %962 = vmatprep.subr.bf16.mxu0 0
    %963 = vmatpush1.bf16.msra.mxu0 %v942
    %964 = vmatprep.subr.bf16.mxu0 0
    %965 = vmatpush1.bf16.msra.mxu0 %v943
    %966 = vmatprep.subr.bf16.mxu0 0
    %967 = vmatpush1.bf16.msra.mxu0 %v944
    %968 = vmatprep.subr.bf16.mxu0 0
    %969 = vmatpush1.bf16.msra.mxu0 %v945
    %970 = vmatprep.subr.bf16.mxu0 0
    %971 = vmatpush1.bf16.msra.mxu0 0
    %972 = vmatprep.subr.bf16.mxu0 0
    %973 = vmatpush1.bf16.msra.mxu0 0
    %974 = vmatprep.subr.bf16.mxu0 0
    %975 = vmatpush1.bf16.msra.mxu0 0
    %976 = vmatprep.subr.bf16.mxu0 0
    %977 = vmatpush1.bf16.msra.mxu0 0
    %978 = vmatprep.subr.bf16.mxu0 0
    %979 = vmatpush1.bf16.msra.mxu0 0
    %980 = vmatprep.subr.bf16.mxu0 0
    %981 = vmatpush1.bf16.msra.mxu0 0
    %982 = vmatprep.subr.bf16.mxu0 0
    %983 = vmatpush1.bf16.msra.mxu0 0
    %984 = vmatprep.subr.bf16.mxu0 0
    %985 = vmatpush1.bf16.msra.mxu0 0
    %986 = vmatprep.mubr.bf16.mxu0 0
    %987 = vmatmul.mubr.bf16.gmra.mrb[0].mxu0 %v867
    %v988 = vpop.f32.mrb[0].mxu0
    %v989 = vadd.f32 %v904, %v988
    %v990 = vpop.f32.mrb[0].mxu0
    %v991 = vpop.f32.mrb[0].mxu0
    %v992 = vadd.f32 %v904, %v991
    %v993 = vpop.f32.mrb[0].mxu0
    %994 = vmatprep.mubr.bf16.mxu0 0
    %995 = vmatmul.mubr.bf16.gmra.mrb[0].mxu0 %v868
    %v996 = vpop.f32.mrb[0].mxu0
    %v997 = vadd.f32 %v904, %v996
    %v998 = vpop.f32.mrb[0].mxu0
    %v999 = vpop.f32.mrb[0].mxu0
    %v1000 = vadd.f32 %v904, %v999
    %v1001 = vpop.f32.mrb[0].mxu0
    %1002 = vmatprep.mubr.bf16.mxu0 0
    %1003 = vmatmul.mubr.bf16.gmra.mrb[0].mxu0 %v869
    %v1004 = vpop.f32.mrb[0].mxu0
    %v1005 = vadd.f32 %v904, %v1004
    %v1006 = vpop.f32.mrb[0].mxu0
    %v1007 = vpop.f32.mrb[0].mxu0
    %v1008 = vadd.f32 %v904, %v1007
    %v1009 = vpop.f32.mrb[0].mxu0
    %1010 = vmatprep.mubr.bf16.mxu0 0
    %1011 = vmatmul.mubr.bf16.gmra.mrb[0].mxu0 %v870
    %v1012 = vpop.f32.mrb[0].mxu0
    %v1013 = vadd.f32 %v904, %v1012
    %v1014 = vpop.f32.mrb[0].mxu0
    %v1015 = vpop.f32.mrb[0].mxu0
    %v1016 = vadd.f32 %v904, %v1015
    %v1017 = vpop.f32.mrb[0].mxu0
    %1018 = vmatprep.mubr.bf16.mxu0 0
    %1019 = vmatmul.mubr.bf16.gmra.mrb[0].mxu0 %v871
    %v1020 = vpop.f32.mrb[0].mxu0
    %v1021 = vadd.f32 %v904, %v1020
    %v1022 = vpop.f32.mrb[0].mxu0
    %v1023 = vpop.f32.mrb[0].mxu0
    %v1024 = vadd.f32 %v904, %v1023
    %v1025 = vpop.f32.mrb[0].mxu0
    %1026 = vmatprep.mubr.bf16.mxu0 0
    %1027 = vmatmul.mubr.bf16.gmra.mrb[0].mxu0 %v872
    %v1028 = vpop.f32.mrb[0].mxu0
    %v1029 = vadd.f32 %v904, %v1028
    %v1030 = vpop.f32.mrb[0].mxu0
    %v1031 = vpop.f32.mrb[0].mxu0
    %v1032 = vadd.f32 %v904, %v1031
    %v1033 = vpop.f32.mrb[0].mxu0
    %1034 = vmatprep.mubr.bf16.mxu0 0
    %1035 = vmatmul.mubr.bf16.gmra.mrb[0].mxu0 %v873
    %v1036 = vpop.f32.mrb[0].mxu0
    %v1037 = vadd.f32 %v904, %v1036
    %v1038 = vpop.f32.mrb[0].mxu0
    %v1039 = vpop.f32.mrb[0].mxu0
    %v1040 = vadd.f32 %v904, %v1039
    %v1041 = vpop.f32.mrb[0].mxu0
    %1042 = vmatprep.mubr.bf16.mxu0 0
    %1043 = vmatmul.mubr.bf16.gmra.mrb[0].mxu0 %v874
    %v1044 = vpop.f32.mrb[0].mxu0
    %v1045 = vadd.f32 %v904, %v1044
    %v1046 = vpop.f32.mrb[0].mxu0
    %v1047 = vpop.f32.mrb[0].mxu0
    %v1048 = vadd.f32 %v904, %v1047
    %v1049 = vpop.f32.mrb[0].mxu0
    %1050 = vmatprep.mubr.bf16.mxu0 0
    %1051 = vmatmul.mubr.bf16.gmra.mrb[0].mxu0 %v875
    %v1052 = vpop.f32.mrb[0].mxu0
    %v1053 = vadd.f32 %v904, %v1052
    %v1054 = vpop.f32.mrb[0].mxu0
    %v1055 = vpop.f32.mrb[0].mxu0
    %v1056 = vadd.f32 %v904, %v1055
    %v1057 = vpop.f32.mrb[0].mxu0
    %1058 = vmatprep.mubr.bf16.mxu0 0
    %1059 = vmatmul.mubr.bf16.gmra.mrb[0].mxu0 %v876
    %v1060 = vpop.f32.mrb[0].mxu0
    %v1061 = vadd.f32 %v904, %v1060
    %v1062 = vpop.f32.mrb[0].mxu0
    %v1063 = vpop.f32.mrb[0].mxu0
    %v1064 = vadd.f32 %v904, %v1063
    %v1065 = vpop.f32.mrb[0].mxu0
    %1066 = vmatprep.mubr.bf16.mxu0 0
    %1067 = vmatmul.mubr.bf16.gmra.mrb[0].mxu0 %v877
    %v1068 = vpop.f32.mrb[0].mxu0
    %v1069 = vadd.f32 %v904, %v1068
    %v1070 = vpop.f32.mrb[0].mxu0
    %v1071 = vpop.f32.mrb[0].mxu0
    %v1072 = vadd.f32 %v904, %v1071
    %v1073 = vpop.f32.mrb[0].mxu0
    %1074 = vmatprep.mubr.bf16.mxu0 0
    %1075 = vmatmul.mubr.bf16.gmra.mrb[0].mxu0 %v878
    %v1076 = vpop.f32.mrb[0].mxu0
    %v1077 = vadd.f32 %v904, %v1076
    %v1078 = vpop.f32.mrb[0].mxu0
    %v1079 = vpop.f32.mrb[0].mxu0
    %v1080 = vadd.f32 %v904, %v1079
    %v1081 = vpop.f32.mrb[0].mxu0
    %1082 = vmatprep.mubr.bf16.mxu0 0
    %1083 = vmatmul.mubr.bf16.gmra.mrb[0].mxu0 %v879
    %v1084 = vpop.f32.mrb[0].mxu0
    %v1085 = vadd.f32 %v904, %v1084
    %v1086 = vpop.f32.mrb[0].mxu0
    %v1087 = vpop.f32.mrb[0].mxu0
    %v1088 = vadd.f32 %v904, %v1087
    %v1089 = vpop.f32.mrb[0].mxu0
    %1090 = vmatprep.mubr.bf16.mxu0 0
    %1091 = vmatmul.mubr.bf16.gmra.mrb[0].mxu0 %v880
    %v1092 = vpop.f32.mrb[0].mxu0
    %v1093 = vadd.f32 %v904, %v1092
    %v1094 = vpop.f32.mrb[0].mxu0
    %v1095 = vpop.f32.mrb[0].mxu0
    %v1096 = vadd.f32 %v904, %v1095
    %v1097 = vpop.f32.mrb[0].mxu0
    %1098 = vmatprep.mubr.bf16.mxu0 0
    %1099 = vmatmul.mubr.bf16.gmra.mrb[0].mxu0 %v881
    %v1100 = vpop.f32.mrb[0].mxu0
    %v1101 = vadd.f32 %v904, %v1100
    %v1102 = vpop.f32.mrb[0].mxu0
    %v1103 = vpop.f32.mrb[0].mxu0
    %v1104 = vadd.f32 %v904, %v1103
    %v1105 = vpop.f32.mrb[0].mxu0
    %1106 = vmatprep.mubr.bf16.mxu0 0
    %1107 = vmatmul.mubr.bf16.gmra.mrb[0].mxu0 %v882
    %v1108 = vpop.f32.mrb[0].mxu0
    %v1109 = vadd.f32 %v904, %v1108
    %v1110 = vpop.f32.mrb[0].mxu0
    %v1111 = vpop.f32.mrb[0].mxu0
    %v1112 = vadd.f32 %v904, %v1111
    %v1113 = vpop.f32.mrb[0].mxu0
    %1114 = vdwg.mxu0
    %1115 = vst [vmem:[#allocation10] sm:$0xff] %v989
    %1116 = vst [vmem:[#allocation10 + $0x8] sm:$0xff] %v992
    %1117 = vst [vmem:[#allocation10 + $0x10] sm:$0xff] %v997
    %1118 = vst [vmem:[#allocation10 + $0x18] sm:$0xff] %v1000
    %1119 = vst [vmem:[#allocation10 + $0x20] sm:$0xff] %v1005
    %1120 = vst [vmem:[#allocation10 + $0x28] sm:$0xff] %v1008
    %1121 = vst [vmem:[#allocation10 + $0x30] sm:$0xff] %v1013
    %1122 = vst [vmem:[#allocation10 + $0x38] sm:$0xff] %v1016
    %1123 = vst [vmem:[#allocation10 + $0x40] sm:$0xff] %v1021
    %1124 = vst [vmem:[#allocation10 + $0x48] sm:$0xff] %v1024
    %1125 = vst [vmem:[#allocation10 + $0x50] sm:$0xff] %v1029
    %1126 = vst [vmem:[#allocation10 + $0x58] sm:$0xff] %v1032
    %1127 = vst [vmem:[#allocation10 + $0x60] sm:$0xff] %v1037
    %1128 = vst [vmem:[#allocation10 + $0x68] sm:$0xff] %v1040
    %1129 = vst [vmem:[#allocation10 + $0x70] sm:$0xff] %v1045
    %1130 = vst [vmem:[#allocation10 + $0x78] sm:$0xff] %v1048
    %1131 = vst [vmem:[#allocation10 + $0x80] sm:$0xff] %v1053
    %1132 = vst [vmem:[#allocation10 + $0x88] sm:$0xff] %v1056
    %1133 = vst [vmem:[#allocation10 + $0x90] sm:$0xff] %v1061
    %1134 = vst [vmem:[#allocation10 + $0x98] sm:$0xff] %v1064
    %1135 = vst [vmem:[#allocation10 + $0xa0] sm:$0xff] %v1069
    %1136 = vst [vmem:[#allocation10 + $0xa8] sm:$0xff] %v1072
    %1137 = vst [vmem:[#allocation10 + $0xb0] sm:$0xff] %v1077
    %1138 = vst [vmem:[#allocation10 + $0xb8] sm:$0xff] %v1080
    %1139 = vst [vmem:[#allocation10 + $0xc0] sm:$0xff] %v1085
    %1140 = vst [vmem:[#allocation10 + $0xc8] sm:$0xff] %v1088
    %1141 = vst [vmem:[#allocation10 + $0xd0] sm:$0xff] %v1093
    %1142 = vst [vmem:[#allocation10 + $0xd8] sm:$0xff] %v1096
    %1143 = vst [vmem:[#allocation10 + $0xe0] sm:$0xff] %v1101
    %1144 = vst [vmem:[#allocation10 + $0xe8] sm:$0xff] %v1104
    %1145 = vst [vmem:[#allocation10 + $0xf0] sm:$0xff] %v1109
    %1146 = vst [vmem:[#allocation10 + $0xf8] sm:$0xff] %v1112
    // Predicated region
    $region46: #{tpu_custom_call.1} parent=1 // pred_check
      _
    $region47: #{tpu_custom_call.1} parent=1 // pred_check_branch
      %1148 = sbr.rel (0) target = $region49
    $region48: #{tpu_custom_call.1} parent=1 // pred_region
      %s1150 = ssub.s32 4096, 4096
      %1151 = vsyncadd [#allocation4], %s1150
      %s1152 = sshll.u32 [#allocation10], 4
      %s1153 = int_to_ptr.vmem [resolvable:$true] %s1152
      %1158 = dma.vmem_to_hbm [thread:$0]  %s1153, 4096, %s7, [#allocation4], 128, 128, 8
    $region49: #{tpu_custom_call.1} parent=1 // pred_fallthru
      _
    // Predicated region
    $region50: #{tpu_custom_call.1} parent=1 // pred_check
      _
    $region51: #{tpu_custom_call.1} parent=1 // pred_check_branch
      %1160 = sbr.rel (0) target = $region53
    $region52: #{tpu_custom_call.1} parent=1 // pred_region
      %1161 = dma.done [#allocation4], 4096
    $region53: #{tpu_custom_call.1} parent=1 // pred_fallthru
      _
    %1162 = vsyncpa [#allocation3], 1
    %1163 = vsyncpa [#allocation6], 1
    %1164 = vsyncpa [#allocation9], 1
    %1165 = vsyncpa [#allocation4], 1

</llo_original>
